<compile_context>
chip_gen: v7x
topology: tpu7x:2x2x1
jax: 0.10.0
libtpu: 0.0.40
codegen_flags: <defaults>
</compile_context>

<pallas_src>
import functools

import jax
import jax.numpy as jnp
from jax import lax
from jax.experimental import pallas as pl
from jax.experimental.pallas import tpu as pltpu

DILATIONS = (1, 2, 4)
LEAKY_SLOPE = 0.01      # torch.nn.LeakyReLU default
BN_EPS = 1e-5           # torch.nn.BatchNorm1d default
NORM_EPS = 1e-12        # torch.nn.functional.normalize default


def _roll(a, shift, axis):
    """jnp.roll(a, shift, axis) via slice+concat.

    pltpu.roll would keep this on the XLU, but tpu.rotate requires the last two
    dims to be (8, 128)-aligned, which these small (B, S[, C]) tiles are not, so
    the proven slice+concat lowering is used instead.
    """
    n = a.shape[axis]
    shift = shift % n
    if shift == 0:
        return a
    lo = lax.slice_in_dim(a, n - shift, n, axis=axis)
    hi = lax.slice_in_dim(a, 0, n - shift, axis=axis)
    return lax.concatenate([lo, hi], dimension=axis)


def _bn_leaky(y, gamma, beta):
    """BatchNorm1d (training-mode biased batch stats over (B, S)) + LeakyReLU."""
    m1 = jnp.mean(y, axis=(0, 1), keepdims=True)
    m2 = jnp.mean(y * y, axis=(0, 1), keepdims=True)
    var = m2 - m1 * m1
    yn = (y - m1) * lax.rsqrt(var + BN_EPS)
    yn = yn * gamma + beta
    return jnp.where(yn >= 0, yn, LEAKY_SLOPE * yn)
    # TODO(synk): BatchNorm running-mean/var buffer updates (training-mode side
    # effect of the torch module) are not emitted; forward numerics are unaffected.


def _fused_kernel(ksize, n_layers,
                  x_ref, wdil_ref,
                  w0_ref, b0_ref, g0_ref, be0_ref,
                  wh_ref, bh_ref, gh_ref, beh_ref,
                  w1_ref, b1_ref, w2_ref, b2_ref,
                  vec_ref, sing_ref):
    """Whole ConvLayersSVD forward; activations stay resident in VMEM."""
    x = x_ref[...]                                     # (B, S) f32
    B, S = x.shape
    L = b0_ref.shape[-1]
    half = ksize // 2

    # --- ParallelConv1DDilations: Conv1d(1,1,K, circular, bias=False) per dilation ---
    chans = []
    for c, dil in enumerate(DILATIONS):
        pad = half * dil
        acc = None
        for k in range(ksize):
            term = wdil_ref[c, k] * _roll(x, pad - k * dil, axis=1)
            acc = term if acc is None else acc + term
        chans.append(acc)
    chans.append(x)                                    # skip-connection channel
    cin = len(chans)

    # --- block layer 0: Conv1d(Cin -> L, circular) as one MXU contraction ---
    cstack = jnp.concatenate([ch[:, :, None] for ch in chans], axis=-1)   # (B,S,Cin)
    taps = [_roll(cstack, half - k, axis=1) for k in range(ksize)]
    hcat = jnp.concatenate(taps, axis=-1)              # (B, S, K*Cin), lane = k*Cin+ci
    y = lax.dot_general(hcat, w0_ref[...], (((2,), (0,)), ((), ())),
                        preferred_element_type=jnp.float32)
    y = y + b0_ref[...][None]                          # (1,1,L) broadcast
    h = _bn_leaky(y, g0_ref[...][None], be0_ref[...][None])

    # --- hidden layers: Conv1d(L -> L, circular); K taps fused into one dot ---
    for i in range(n_layers):
        taps = [_roll(h, half - k, axis=1) for k in range(ksize)]
        hcat = jnp.concatenate(taps, axis=-1)          # (B, S, K*L), lane = k*L+l_in
        y = lax.dot_general(hcat, wh_ref[i], (((2,), (0,)), ((), ())),
                            preferred_element_type=jnp.float32)
        y = y + bh_ref[i][None]
        h = _bn_leaky(y, gh_ref[i][None], beh_ref[i][None])

    # --- flatten to a lane-dense (B, 1, S*L) feature (kernel order q = s*L + l) ---
    feat = jnp.concatenate([h[:, s:s + 1, :] for s in range(S)], axis=-1)

    # --- mlp_block: Linear(S*L -> S*L), then per-latent-vector L2 normalization ---
    # w1 rows are in kernel order, columns in torch-flatten order (l*S + s).
    fv = lax.dot_general(feat, w1_ref[...], (((2,), (0,)), ((), ())),
                         preferred_element_type=jnp.float32)
    fv = fv + b1_ref[...][None]                        # (B, 1, S*L), torch order
    pieces = []
    for l in range(L):
        seg = fv[:, :, l * S:(l + 1) * S]              # latent vector l = contiguous S lanes
        ssq = jnp.sum(seg * seg, axis=-1, keepdims=True)
        inv = lax.rsqrt(jnp.maximum(ssq, NORM_EPS * NORM_EPS))  # 1 / max(||v||, eps)
        pieces.append(seg * inv)
    vec_ref[...] = jnp.concatenate(pieces, axis=-1)    # lane-dense (B, 1, S*L) store

    # --- mlp_singval: Linear(S*L -> L) + ParamSigmoid(0, 20, 0) ---
    sv = lax.dot_general(feat, w2_ref[...], (((2,), (0,)), ((), ())),
                         preferred_element_type=jnp.float32)
    sv = sv + b2_ref[...][None]
    sing_ref[...] = 20.0 / (1.0 + jnp.exp(-sv))        # sigmoid(x) * (20 - 0) + 0


def conv_layers_svd_forward(x, params, *, state_dimension, n_latent,
                            kernel_size, n_layers):
    S, L, K, NL = state_dimension, n_latent, kernel_size, n_layers
    D = L * S
    CIN = len(DILATIONS) + 1

    x = jnp.atleast_2d(x).reshape(-1, S).astype(jnp.float32)   # torch: x.view(len(x), 1, -1)
    B = x.shape[0]

    # ---------- plain-JAX parameter glue: pack torch-convention weights ----------
    wdil = params["w_dil"].astype(jnp.float32)                                 # (3, K)
    # Conv1d(Cin->L): (L, Cin, K) -> (K, Cin, L) -> (K*Cin, L); row = k*Cin + ci.
    w0 = jnp.transpose(params["w_conv0"], (2, 1, 0)).reshape(K * CIN, L).astype(jnp.float32)
    # Conv1d(L->L) x NL: (NL, Lout, Lin, K) -> (NL, K, Lin, Lout) -> (NL, K*L, L).
    wh = jnp.transpose(params["w_convh"], (0, 3, 2, 1)).reshape(-1, K * L, L).astype(jnp.float32)
    b0 = params["b_conv0"].reshape(1, L)
    g0 = params["g_bn0"].reshape(1, L)
    be0 = params["be_bn0"].reshape(1, L)
    bh = params["b_convh"].reshape(-1, 1, L)
    gh = params["g_bnh"].reshape(-1, 1, L)
    beh = params["be_bnh"].reshape(-1, 1, L)

    # Kernel flat index q = s*L + l  <->  torch flatten index j = l*S + s.
    q = jnp.arange(D)
    perm_in = (q % L) * S + (q // L)
    w1 = params["w_lin1"][:, perm_in].T.astype(jnp.float32)                    # (D_in_kernel, D_out)
    w2 = params["w_lin2"][:, perm_in].T.astype(jnp.float32)                    # (D_in_kernel, L)
    b1 = params["b_lin1"].reshape(1, D)
    b2 = params["b_lin2"].reshape(1, L)

    vspec = pl.BlockSpec(memory_space=pltpu.MemorySpace.VMEM)
    sspec = pl.BlockSpec(memory_space=pltpu.MemorySpace.SMEM)

    # Single fused, un-gridded call: BatchNorm needs full-batch statistics, so the
    # feature stage cannot be tiled over B/S without a cross-tile stat combine; at
    # these sizes everything fits VMEM with large headroom.  For large L*S the two
    # head Linears should be split out into a gridded, tiled matmul (per-generation
    # tile sizes / vmem_limit_bytes); here D = 128 so the weights are only 64 KiB.
    vec3, sing3 = pl.pallas_call(
        functools.partial(_fused_kernel, K, NL),
        out_shape=(jax.ShapeDtypeStruct((B, 1, D), jnp.float32),
                   jax.ShapeDtypeStruct((B, 1, L), jnp.float32)),
        in_specs=[vspec, sspec] + [vspec] * 12,
        out_specs=(vspec, vspec),
    )(x, wdil, w0, b0, g0, be0, wh, bh, gh, beh, w1, b1, w2, b2)

    # Layout glue: vectors.view(B, L, S), concat singvals, transpose(1, 2).
    vectors = vec3.reshape(B, L, S)
    sing = sing3.reshape(B, L)
    out = jnp.concatenate([vectors, sing[:, :, None]], axis=-1)                # (B, L, S+1)
    return jnp.transpose(out, (0, 2, 1))                                       # (B, S+1, L)


def init_params(key, S, L, K, NL):
    """Deterministic synthetic parameters in PyTorch shapes/conventions."""
    ks = jax.random.split(key, 13)

    def rnd(k, shape, scale=0.3):
        return (scale * jax.random.normal(k, shape)).astype(jnp.float32)

    nl = max(NL, 1)
    D = L * S
    return {
        # ParallelConv1DDilations: 3 x Conv1d(1, 1, K, bias=False) -> stacked (3, K)
        "w_dil": rnd(ks[0], (len(DILATIONS), K)),
        # PeriodicConv1DBlock first layer: Conv1d(4, L, K) + BatchNorm1d(L)
        "w_conv0": rnd(ks[1], (L, len(DILATIONS) + 1, K)),
        "b_conv0": rnd(ks[2], (L,), 0.1),
        "g_bn0": 1.0 + rnd(ks[3], (L,), 0.1),
        "be_bn0": rnd(ks[4], (L,), 0.1),
        # n_layers x [Conv1d(L, L, K) + BatchNorm1d(L)]
        "w_convh": rnd(ks[5], (nl, L, L, K)),
        "b_convh": rnd(ks[6], (nl, L), 0.1),
        "g_bnh": 1.0 + rnd(ks[7], (nl, L), 0.1),
        "be_bnh": rnd(ks[8], (nl, L), 0.1),
        # mlp_block: Linear(L*S, L*S);  mlp_singval: Linear(L*S, L)
        "w_lin1": rnd(ks[9], (D, D), 0.1),
        "b_lin1": rnd(ks[10], (D,), 0.1),
        "w_lin2": rnd(ks[11], (L, D), 0.1),
        "b_lin2": rnd(ks[12], (L,), 0.1),
    }


if __name__ == "__main__":
    STATE_DIM, N_LATENT, KERNEL_SIZE, N_LAYERS, BATCH = 16, 8, 3, 2, 2

    key = jax.random.PRNGKey(0)
    kx, kp = jax.random.split(key)
    x = jax.random.normal(kx, (BATCH, STATE_DIM), dtype=jnp.float32)
    params = init_params(kp, STATE_DIM, N_LATENT, KERNEL_SIZE, N_LAYERS)

    out = conv_layers_svd_forward(
        x, params,
        state_dimension=STATE_DIM, n_latent=N_LATENT,
        kernel_size=KERNEL_SIZE, n_layers=N_LAYERS)
    out = jax.block_until_ready(out)

    assert out.shape == (BATCH, STATE_DIM + 1, N_LATENT), out.shape
    assert bool(jnp.all(jnp.isfinite(out)))
    print("KERNEL_OK")
</pallas_src>

<mosaic_0001>
module attributes {stable_mosaic.version = 11 : i64} {
  func.func @_fused_kernel(%arg0: memref<2x16xf32, #tpu.memory_space<vmem>>, %arg1: memref<3x3xf32, #tpu.memory_space<smem>>, %arg2: memref<12x8xf32, #tpu.memory_space<vmem>>, %arg3: memref<1x8xf32, #tpu.memory_space<vmem>>, %arg4: memref<1x8xf32, #tpu.memory_space<vmem>>, %arg5: memref<1x8xf32, #tpu.memory_space<vmem>>, %arg6: memref<2x24x8xf32, #tpu.memory_space<vmem>>, %arg7: memref<2x1x8xf32, #tpu.memory_space<vmem>>, %arg8: memref<2x1x8xf32, #tpu.memory_space<vmem>>, %arg9: memref<2x1x8xf32, #tpu.memory_space<vmem>>, %arg10: memref<128x128xf32, #tpu.memory_space<vmem>>, %arg11: memref<1x128xf32, #tpu.memory_space<vmem>>, %arg12: memref<128x8xf32, #tpu.memory_space<vmem>>, %arg13: memref<1x8xf32, #tpu.memory_space<vmem>>, %arg14: memref<2x1x128xf32, #tpu.memory_space<vmem>>, %arg15: memref<2x1x8xf32, #tpu.memory_space<vmem>>) attributes {dimension_semantics = [], scalar_prefetch = 0 : i64, scratch_operands = 0 : i64, tpu.core_type = #tpu.core_type<tc>} {
    %c0 = arith.constant 0 : index
    %c0_0 = arith.constant 0 : index
    %0 = vector.load %arg0[%c0, %c0_0] : memref<2x16xf32, #tpu.memory_space<vmem>>, vector<2x16xf32>
    %c0_1 = arith.constant 0 : index
    %c0_2 = arith.constant 0 : index
    %1 = memref.load %arg1[%c0_1, %c0_2] : memref<3x3xf32, #tpu.memory_space<smem>>
    %2 = vector.extract_strided_slice %0 {offsets = [0, 15], sizes = [2, 1], strides = [1, 1]} : vector<2x16xf32> to vector<2x1xf32>
    %3 = vector.extract_strided_slice %0 {offsets = [0, 0], sizes = [2, 15], strides = [1, 1]} : vector<2x16xf32> to vector<2x15xf32>
    %4 = tpu.concatenate %2, %3 in 1 : vector<2x1xf32>, vector<2x15xf32> -> vector<2x16xf32>
    %5 = vector.broadcast %1 : f32 to vector<2x16xf32>
    %6 = arith.mulf %5, %4 : vector<2x16xf32>
    %c0_3 = arith.constant 0 : index
    %c1 = arith.constant 1 : index
    %7 = memref.load %arg1[%c0_3, %c1] : memref<3x3xf32, #tpu.memory_space<smem>>
    %8 = vector.broadcast %7 : f32 to vector<2x16xf32>
    %9 = arith.mulf %8, %0 : vector<2x16xf32>
    %10 = arith.addf %6, %9 : vector<2x16xf32>
    %c0_4 = arith.constant 0 : index
    %c2 = arith.constant 2 : index
    %11 = memref.load %arg1[%c0_4, %c2] : memref<3x3xf32, #tpu.memory_space<smem>>
    %12 = vector.extract_strided_slice %0 {offsets = [0, 1], sizes = [2, 15], strides = [1, 1]} : vector<2x16xf32> to vector<2x15xf32>
    %13 = vector.extract_strided_slice %0 {offsets = [0, 0], sizes = [2, 1], strides = [1, 1]} : vector<2x16xf32> to vector<2x1xf32>
    %14 = tpu.concatenate %12, %13 in 1 : vector<2x15xf32>, vector<2x1xf32> -> vector<2x16xf32>
    %15 = vector.broadcast %11 : f32 to vector<2x16xf32>
    %16 = arith.mulf %15, %14 : vector<2x16xf32>
    %17 = arith.addf %10, %16 : vector<2x16xf32>
    %c1_5 = arith.constant 1 : index
    %c0_6 = arith.constant 0 : index
    %18 = memref.load %arg1[%c1_5, %c0_6] : memref<3x3xf32, #tpu.memory_space<smem>>
    %19 = vector.extract_strided_slice %0 {offsets = [0, 14], sizes = [2, 2], strides = [1, 1]} : vector<2x16xf32> to vector<2x2xf32>
    %20 = vector.extract_strided_slice %0 {offsets = [0, 0], sizes = [2, 14], strides = [1, 1]} : vector<2x16xf32> to vector<2x14xf32>
    %21 = tpu.concatenate %19, %20 in 1 : vector<2x2xf32>, vector<2x14xf32> -> vector<2x16xf32>
    %22 = vector.broadcast %18 : f32 to vector<2x16xf32>
    %23 = arith.mulf %22, %21 : vector<2x16xf32>
    %c1_7 = arith.constant 1 : index
    %c1_8 = arith.constant 1 : index
    %24 = memref.load %arg1[%c1_7, %c1_8] : memref<3x3xf32, #tpu.memory_space<smem>>
    %25 = vector.broadcast %24 : f32 to vector<2x16xf32>
    %26 = arith.mulf %25, %0 : vector<2x16xf32>
    %27 = arith.addf %23, %26 : vector<2x16xf32>
    %c1_9 = arith.constant 1 : index
    %c2_10 = arith.constant 2 : index
    %28 = memref.load %arg1[%c1_9, %c2_10] : memref<3x3xf32, #tpu.memory_space<smem>>
    %29 = vector.extract_strided_slice %0 {offsets = [0, 2], sizes = [2, 14], strides = [1, 1]} : vector<2x16xf32> to vector<2x14xf32>
    %30 = vector.extract_strided_slice %0 {offsets = [0, 0], sizes = [2, 2], strides = [1, 1]} : vector<2x16xf32> to vector<2x2xf32>
    %31 = tpu.concatenate %29, %30 in 1 : vector<2x14xf32>, vector<2x2xf32> -> vector<2x16xf32>
    %32 = vector.broadcast %28 : f32 to vector<2x16xf32>
    %33 = arith.mulf %32, %31 : vector<2x16xf32>
    %34 = arith.addf %27, %33 : vector<2x16xf32>
    %c2_11 = arith.constant 2 : index
    %c0_12 = arith.constant 0 : index
    %35 = memref.load %arg1[%c2_11, %c0_12] : memref<3x3xf32, #tpu.memory_space<smem>>
    %36 = vector.extract_strided_slice %0 {offsets = [0, 12], sizes = [2, 4], strides = [1, 1]} : vector<2x16xf32> to vector<2x4xf32>
    %37 = vector.extract_strided_slice %0 {offsets = [0, 0], sizes = [2, 12], strides = [1, 1]} : vector<2x16xf32> to vector<2x12xf32>
    %38 = tpu.concatenate %36, %37 in 1 : vector<2x4xf32>, vector<2x12xf32> -> vector<2x16xf32>
    %39 = vector.broadcast %35 : f32 to vector<2x16xf32>
    %40 = arith.mulf %39, %38 : vector<2x16xf32>
    %c2_13 = arith.constant 2 : index
    %c1_14 = arith.constant 1 : index
    %41 = memref.load %arg1[%c2_13, %c1_14] : memref<3x3xf32, #tpu.memory_space<smem>>
    %42 = vector.broadcast %41 : f32 to vector<2x16xf32>
    %43 = arith.mulf %42, %0 : vector<2x16xf32>
    %44 = arith.addf %40, %43 : vector<2x16xf32>
    %c2_15 = arith.constant 2 : index
    %c2_16 = arith.constant 2 : index
    %45 = memref.load %arg1[%c2_15, %c2_16] : memref<3x3xf32, #tpu.memory_space<smem>>
    %46 = vector.extract_strided_slice %0 {offsets = [0, 4], sizes = [2, 12], strides = [1, 1]} : vector<2x16xf32> to vector<2x12xf32>
    %47 = vector.extract_strided_slice %0 {offsets = [0, 0], sizes = [2, 4], strides = [1, 1]} : vector<2x16xf32> to vector<2x4xf32>
    %48 = tpu.concatenate %46, %47 in 1 : vector<2x12xf32>, vector<2x4xf32> -> vector<2x16xf32>
    %49 = vector.broadcast %45 : f32 to vector<2x16xf32>
    %50 = arith.mulf %49, %48 : vector<2x16xf32>
    %51 = arith.addf %44, %50 : vector<2x16xf32>
    %52 = vector.shape_cast %17 : vector<2x16xf32> to vector<2x16x1xf32>
    %53 = vector.shape_cast %34 : vector<2x16xf32> to vector<2x16x1xf32>
    %54 = vector.shape_cast %51 : vector<2x16xf32> to vector<2x16x1xf32>
    %55 = vector.shape_cast %0 : vector<2x16xf32> to vector<2x16x1xf32>
    %56 = tpu.concatenate %52, %53, %54, %55 in 2 : vector<2x16x1xf32>, vector<2x16x1xf32>, vector<2x16x1xf32>, vector<2x16x1xf32> -> vector<2x16x4xf32>
    %57 = vector.extract_strided_slice %56 {offsets = [0, 15, 0], sizes = [2, 1, 4], strides = [1, 1, 1]} : vector<2x16x4xf32> to vector<2x1x4xf32>
    %58 = vector.extract_strided_slice %56 {offsets = [0, 0, 0], sizes = [2, 15, 4], strides = [1, 1, 1]} : vector<2x16x4xf32> to vector<2x15x4xf32>
    %59 = tpu.concatenate %57, %58 in 1 : vector<2x1x4xf32>, vector<2x15x4xf32> -> vector<2x16x4xf32>
    %60 = vector.extract_strided_slice %56 {offsets = [0, 1, 0], sizes = [2, 15, 4], strides = [1, 1, 1]} : vector<2x16x4xf32> to vector<2x15x4xf32>
    %61 = vector.extract_strided_slice %56 {offsets = [0, 0, 0], sizes = [2, 1, 4], strides = [1, 1, 1]} : vector<2x16x4xf32> to vector<2x1x4xf32>
    %62 = tpu.concatenate %60, %61 in 1 : vector<2x15x4xf32>, vector<2x1x4xf32> -> vector<2x16x4xf32>
    %63 = tpu.concatenate %59, %56, %62 in 2 : vector<2x16x4xf32>, vector<2x16x4xf32>, vector<2x16x4xf32> -> vector<2x16x12xf32>
    %c0_17 = arith.constant 0 : index
    %c0_18 = arith.constant 0 : index
    %64 = vector.load %arg2[%c0_17, %c0_18] : memref<12x8xf32, #tpu.memory_space<vmem>>, vector<12x8xf32>
    %cst = arith.constant dense<0.000000e+00> : vector<2x16x8xf32>
    %65 = tpu.matmul %63, %64, %cst {dimension_numbers = #tpu.dot_dimension_numbers<[2], [0], [0, 1], [1], [0, 0, 0, 1, 1, 1], [], []>} : vector<2x16x12xf32>, vector<12x8xf32>, vector<2x16x8xf32> -> vector<2x16x8xf32>
    %c0_19 = arith.constant 0 : index
    %c0_20 = arith.constant 0 : index
    %66 = vector.load %arg3[%c0_19, %c0_20] : memref<1x8xf32, #tpu.memory_space<vmem>>, vector<1x8xf32>
    %67 = vector.shape_cast %66 : vector<1x8xf32> to vector<1x1x8xf32>
    %68 = vector.broadcast %67 : vector<1x1x8xf32> to vector<2x16x8xf32>
    %69 = arith.addf %65, %68 : vector<2x16x8xf32>
    %c0_21 = arith.constant 0 : index
    %c0_22 = arith.constant 0 : index
    %70 = vector.load %arg4[%c0_21, %c0_22] : memref<1x8xf32, #tpu.memory_space<vmem>>, vector<1x8xf32>
    %71 = vector.shape_cast %70 : vector<1x8xf32> to vector<1x1x8xf32>
    %c0_23 = arith.constant 0 : index
    %c0_24 = arith.constant 0 : index
    %72 = vector.load %arg5[%c0_23, %c0_24] : memref<1x8xf32, #tpu.memory_space<vmem>>, vector<1x8xf32>
    %73 = vector.shape_cast %72 : vector<1x8xf32> to vector<1x1x8xf32>
    %cst_25 = arith.constant dense<0.000000e+00> : vector<8xf32>
    %74 = vector.multi_reduction <add>, %69, %cst_25 [0, 1] : vector<2x16x8xf32> to vector<8xf32>
    %75 = vector.shape_cast %74 : vector<8xf32> to vector<1x1x8xf32>
    %cst_26 = arith.constant 3.200000e+01 : f32
    %76 = vector.broadcast %cst_26 : f32 to vector<1x1x8xf32>
    %77 = arith.divf %75, %76 : vector<1x1x8xf32>
    %78 = arith.mulf %69, %69 : vector<2x16x8xf32>
    %cst_27 = arith.constant dense<0.000000e+00> : vector<8xf32>
    %79 = vector.multi_reduction <add>, %78, %cst_27 [0, 1] : vector<2x16x8xf32> to vector<8xf32>
    %80 = vector.shape_cast %79 : vector<8xf32> to vector<1x1x8xf32>
    %cst_28 = arith.constant 3.200000e+01 : f32
    %81 = vector.broadcast %cst_28 : f32 to vector<1x1x8xf32>
    %82 = arith.divf %80, %81 : vector<1x1x8xf32>
    %83 = arith.mulf %77, %77 : vector<1x1x8xf32>
    %84 = arith.subf %82, %83 : vector<1x1x8xf32>
    %85 = vector.broadcast %77 : vector<1x1x8xf32> to vector<2x16x8xf32>
    %86 = arith.subf %69, %85 : vector<2x16x8xf32>
    %cst_29 = arith.constant 9.99999974E-6 : f32
    %87 = vector.broadcast %cst_29 : f32 to vector<1x1x8xf32>
    %88 = arith.addf %84, %87 : vector<1x1x8xf32>
    %89 = math.rsqrt %88 : vector<1x1x8xf32>
    %90 = vector.broadcast %89 : vector<1x1x8xf32> to vector<2x16x8xf32>
    %91 = arith.mulf %86, %90 : vector<2x16x8xf32>
    %92 = vector.broadcast %71 : vector<1x1x8xf32> to vector<2x16x8xf32>
    %93 = arith.mulf %91, %92 : vector<2x16x8xf32>
    %94 = vector.broadcast %73 : vector<1x1x8xf32> to vector<2x16x8xf32>
    %95 = arith.addf %93, %94 : vector<2x16x8xf32>
    %cst_30 = arith.constant 0.000000e+00 : f32
    %96 = vector.broadcast %cst_30 : f32 to vector<2x16x8xf32>
    %97 = arith.cmpf oge, %95, %96 : vector<2x16x8xf32>
    %cst_31 = arith.constant 0.00999999977 : f32
    %98 = vector.broadcast %cst_31 : f32 to vector<2x16x8xf32>
    %99 = arith.mulf %98, %95 : vector<2x16x8xf32>
    %100 = arith.select %97, %95, %99 : vector<2x16x8xi1>, vector<2x16x8xf32>
    %101 = vector.extract_strided_slice %100 {offsets = [0, 15, 0], sizes = [2, 1, 8], strides = [1, 1, 1]} : vector<2x16x8xf32> to vector<2x1x8xf32>
    %102 = vector.extract_strided_slice %100 {offsets = [0, 0, 0], sizes = [2, 15, 8], strides = [1, 1, 1]} : vector<2x16x8xf32> to vector<2x15x8xf32>
    %103 = tpu.concatenate %101, %102 in 1 : vector<2x1x8xf32>, vector<2x15x8xf32> -> vector<2x16x8xf32>
    %104 = vector.extract_strided_slice %100 {offsets = [0, 1, 0], sizes = [2, 15, 8], strides = [1, 1, 1]} : vector<2x16x8xf32> to vector<2x15x8xf32>
    %105 = vector.extract_strided_slice %100 {offsets = [0, 0, 0], sizes = [2, 1, 8], strides = [1, 1, 1]} : vector<2x16x8xf32> to vector<2x1x8xf32>
    %106 = tpu.concatenate %104, %105 in 1 : vector<2x15x8xf32>, vector<2x1x8xf32> -> vector<2x16x8xf32>
    %107 = tpu.concatenate %103, %100, %106 in 2 : vector<2x16x8xf32>, vector<2x16x8xf32>, vector<2x16x8xf32> -> vector<2x16x24xf32>
    %c0_32 = arith.constant 0 : index
    %c0_33 = arith.constant 0 : index
    %c0_34 = arith.constant 0 : index
    %108 = vector.load %arg6[%c0_32, %c0_33, %c0_34] : memref<2x24x8xf32, #tpu.memory_space<vmem>>, vector<1x24x8xf32>
    %109 = vector.shape_cast %108 : vector<1x24x8xf32> to vector<24x8xf32>
    %cst_35 = arith.constant dense<0.000000e+00> : vector<2x16x8xf32>
    %110 = tpu.matmul %107, %109, %cst_35 {dimension_numbers = #tpu.dot_dimension_numbers<[2], [0], [0, 1], [1], [0, 0, 0, 1, 1, 1], [], []>} : vector<2x16x24xf32>, vector<24x8xf32>, vector<2x16x8xf32> -> vector<2x16x8xf32>
    %c0_36 = arith.constant 0 : index
    %c0_37 = arith.constant 0 : index
    %c0_38 = arith.constant 0 : index
    %111 = vector.load %arg7[%c0_36, %c0_37, %c0_38] : memref<2x1x8xf32, #tpu.memory_space<vmem>>, vector<1x1x8xf32>
    %112 = vector.shape_cast %111 : vector<1x1x8xf32> to vector<1x8xf32>
    %113 = vector.shape_cast %112 : vector<1x8xf32> to vector<1x1x8xf32>
    %114 = vector.broadcast %113 : vector<1x1x8xf32> to vector<2x16x8xf32>
    %115 = arith.addf %110, %114 : vector<2x16x8xf32>
    %c0_39 = arith.constant 0 : index
    %c0_40 = arith.constant 0 : index
    %c0_41 = arith.constant 0 : index
    %116 = vector.load %arg8[%c0_39, %c0_40, %c0_41] : memref<2x1x8xf32, #tpu.memory_space<vmem>>, vector<1x1x8xf32>
    %117 = vector.shape_cast %116 : vector<1x1x8xf32> to vector<1x8xf32>
    %118 = vector.shape_cast %117 : vector<1x8xf32> to vector<1x1x8xf32>
    %c0_42 = arith.constant 0 : index
    %c0_43 = arith.constant 0 : index
    %c0_44 = arith.constant 0 : index
    %119 = vector.load %arg9[%c0_42, %c0_43, %c0_44] : memref<2x1x8xf32, #tpu.memory_space<vmem>>, vector<1x1x8xf32>
    %120 = vector.shape_cast %119 : vector<1x1x8xf32> to vector<1x8xf32>
    %121 = vector.shape_cast %120 : vector<1x8xf32> to vector<1x1x8xf32>
    %cst_45 = arith.constant dense<0.000000e+00> : vector<8xf32>
    %122 = vector.multi_reduction <add>, %115, %cst_45 [0, 1] : vector<2x16x8xf32> to vector<8xf32>
    %123 = vector.shape_cast %122 : vector<8xf32> to vector<1x1x8xf32>
    %cst_46 = arith.constant 3.200000e+01 : f32
    %124 = vector.broadcast %cst_46 : f32 to vector<1x1x8xf32>
    %125 = arith.divf %123, %124 : vector<1x1x8xf32>
    %126 = arith.mulf %115, %115 : vector<2x16x8xf32>
    %cst_47 = arith.constant dense<0.000000e+00> : vector<8xf32>
    %127 = vector.multi_reduction <add>, %126, %cst_47 [0, 1] : vector<2x16x8xf32> to vector<8xf32>
    %128 = vector.shape_cast %127 : vector<8xf32> to vector<1x1x8xf32>
    %cst_48 = arith.constant 3.200000e+01 : f32
    %129 = vector.broadcast %cst_48 : f32 to vector<1x1x8xf32>
    %130 = arith.divf %128, %129 : vector<1x1x8xf32>
    %131 = arith.mulf %125, %125 : vector<1x1x8xf32>
    %132 = arith.subf %130, %131 : vector<1x1x8xf32>
    %133 = vector.broadcast %125 : vector<1x1x8xf32> to vector<2x16x8xf32>
    %134 = arith.subf %115, %133 : vector<2x16x8xf32>
    %cst_49 = arith.constant 9.99999974E-6 : f32
    %135 = vector.broadcast %cst_49 : f32 to vector<1x1x8xf32>
    %136 = arith.addf %132, %135 : vector<1x1x8xf32>
    %137 = math.rsqrt %136 : vector<1x1x8xf32>
    %138 = vector.broadcast %137 : vector<1x1x8xf32> to vector<2x16x8xf32>
    %139 = arith.mulf %134, %138 : vector<2x16x8xf32>
    %140 = vector.broadcast %118 : vector<1x1x8xf32> to vector<2x16x8xf32>
    %141 = arith.mulf %139, %140 : vector<2x16x8xf32>
    %142 = vector.broadcast %121 : vector<1x1x8xf32> to vector<2x16x8xf32>
    %143 = arith.addf %141, %142 : vector<2x16x8xf32>
    %cst_50 = arith.constant 0.000000e+00 : f32
    %144 = vector.broadcast %cst_50 : f32 to vector<2x16x8xf32>
    %145 = arith.cmpf oge, %143, %144 : vector<2x16x8xf32>
    %cst_51 = arith.constant 0.00999999977 : f32
    %146 = vector.broadcast %cst_51 : f32 to vector<2x16x8xf32>
    %147 = arith.mulf %146, %143 : vector<2x16x8xf32>
    %148 = arith.select %145, %143, %147 : vector<2x16x8xi1>, vector<2x16x8xf32>
    %149 = vector.extract_strided_slice %148 {offsets = [0, 15, 0], sizes = [2, 1, 8], strides = [1, 1, 1]} : vector<2x16x8xf32> to vector<2x1x8xf32>
    %150 = vector.extract_strided_slice %148 {offsets = [0, 0, 0], sizes = [2, 15, 8], strides = [1, 1, 1]} : vector<2x16x8xf32> to vector<2x15x8xf32>
    %151 = tpu.concatenate %149, %150 in 1 : vector<2x1x8xf32>, vector<2x15x8xf32> -> vector<2x16x8xf32>
    %152 = vector.extract_strided_slice %148 {offsets = [0, 1, 0], sizes = [2, 15, 8], strides = [1, 1, 1]} : vector<2x16x8xf32> to vector<2x15x8xf32>
    %153 = vector.extract_strided_slice %148 {offsets = [0, 0, 0], sizes = [2, 1, 8], strides = [1, 1, 1]} : vector<2x16x8xf32> to vector<2x1x8xf32>
    %154 = tpu.concatenate %152, %153 in 1 : vector<2x15x8xf32>, vector<2x1x8xf32> -> vector<2x16x8xf32>
    %155 = tpu.concatenate %151, %148, %154 in 2 : vector<2x16x8xf32>, vector<2x16x8xf32>, vector<2x16x8xf32> -> vector<2x16x24xf32>
    %c1_52 = arith.constant 1 : index
    %c0_53 = arith.constant 0 : index
    %c0_54 = arith.constant 0 : index
    %156 = vector.load %arg6[%c1_52, %c0_53, %c0_54] : memref<2x24x8xf32, #tpu.memory_space<vmem>>, vector<1x24x8xf32>
    %157 = vector.shape_cast %156 : vector<1x24x8xf32> to vector<24x8xf32>
    %cst_55 = arith.constant dense<0.000000e+00> : vector<2x16x8xf32>
    %158 = tpu.matmul %155, %157, %cst_55 {dimension_numbers = #tpu.dot_dimension_numbers<[2], [0], [0, 1], [1], [0, 0, 0, 1, 1, 1], [], []>} : vector<2x16x24xf32>, vector<24x8xf32>, vector<2x16x8xf32> -> vector<2x16x8xf32>
    %c1_56 = arith.constant 1 : index
    %c0_57 = arith.constant 0 : index
    %c0_58 = arith.constant 0 : index
    %159 = vector.load %arg7[%c1_56, %c0_57, %c0_58] : memref<2x1x8xf32, #tpu.memory_space<vmem>>, vector<1x1x8xf32>
    %160 = vector.shape_cast %159 : vector<1x1x8xf32> to vector<1x8xf32>
    %161 = vector.shape_cast %160 : vector<1x8xf32> to vector<1x1x8xf32>
    %162 = vector.broadcast %161 : vector<1x1x8xf32> to vector<2x16x8xf32>
    %163 = arith.addf %158, %162 : vector<2x16x8xf32>
    %c1_59 = arith.constant 1 : index
    %c0_60 = arith.constant 0 : index
    %c0_61 = arith.constant 0 : index
    %164 = vector.load %arg8[%c1_59, %c0_60, %c0_61] : memref<2x1x8xf32, #tpu.memory_space<vmem>>, vector<1x1x8xf32>
    %165 = vector.shape_cast %164 : vector<1x1x8xf32> to vector<1x8xf32>
    %166 = vector.shape_cast %165 : vector<1x8xf32> to vector<1x1x8xf32>
    %c1_62 = arith.constant 1 : index
    %c0_63 = arith.constant 0 : index
    %c0_64 = arith.constant 0 : index
    %167 = vector.load %arg9[%c1_62, %c0_63, %c0_64] : memref<2x1x8xf32, #tpu.memory_space<vmem>>, vector<1x1x8xf32>
    %168 = vector.shape_cast %167 : vector<1x1x8xf32> to vector<1x8xf32>
    %169 = vector.shape_cast %168 : vector<1x8xf32> to vector<1x1x8xf32>
    %cst_65 = arith.constant dense<0.000000e+00> : vector<8xf32>
    %170 = vector.multi_reduction <add>, %163, %cst_65 [0, 1] : vector<2x16x8xf32> to vector<8xf32>
    %171 = vector.shape_cast %170 : vector<8xf32> to vector<1x1x8xf32>
    %cst_66 = arith.constant 3.200000e+01 : f32
    %172 = vector.broadcast %cst_66 : f32 to vector<1x1x8xf32>
    %173 = arith.divf %171, %172 : vector<1x1x8xf32>
    %174 = arith.mulf %163, %163 : vector<2x16x8xf32>
    %cst_67 = arith.constant dense<0.000000e+00> : vector<8xf32>
    %175 = vector.multi_reduction <add>, %174, %cst_67 [0, 1] : vector<2x16x8xf32> to vector<8xf32>
    %176 = vector.shape_cast %175 : vector<8xf32> to vector<1x1x8xf32>
    %cst_68 = arith.constant 3.200000e+01 : f32
    %177 = vector.broadcast %cst_68 : f32 to vector<1x1x8xf32>
    %178 = arith.divf %176, %177 : vector<1x1x8xf32>
    %179 = arith.mulf %173, %173 : vector<1x1x8xf32>
    %180 = arith.subf %178, %179 : vector<1x1x8xf32>
    %181 = vector.broadcast %173 : vector<1x1x8xf32> to vector<2x16x8xf32>
    %182 = arith.subf %163, %181 : vector<2x16x8xf32>
    %cst_69 = arith.constant 9.99999974E-6 : f32
    %183 = vector.broadcast %cst_69 : f32 to vector<1x1x8xf32>
    %184 = arith.addf %180, %183 : vector<1x1x8xf32>
    %185 = math.rsqrt %184 : vector<1x1x8xf32>
    %186 = vector.broadcast %185 : vector<1x1x8xf32> to vector<2x16x8xf32>
    %187 = arith.mulf %182, %186 : vector<2x16x8xf32>
    %188 = vector.broadcast %166 : vector<1x1x8xf32> to vector<2x16x8xf32>
    %189 = arith.mulf %187, %188 : vector<2x16x8xf32>
    %190 = vector.broadcast %169 : vector<1x1x8xf32> to vector<2x16x8xf32>
    %191 = arith.addf %189, %190 : vector<2x16x8xf32>
    %cst_70 = arith.constant 0.000000e+00 : f32
    %192 = vector.broadcast %cst_70 : f32 to vector<2x16x8xf32>
    %193 = arith.cmpf oge, %191, %192 : vector<2x16x8xf32>
    %cst_71 = arith.constant 0.00999999977 : f32
    %194 = vector.broadcast %cst_71 : f32 to vector<2x16x8xf32>
    %195 = arith.mulf %194, %191 : vector<2x16x8xf32>
    %196 = arith.select %193, %191, %195 : vector<2x16x8xi1>, vector<2x16x8xf32>
    %197 = vector.extract_strided_slice %196 {offsets = [0, 0, 0], sizes = [2, 1, 8], strides = [1, 1, 1]} : vector<2x16x8xf32> to vector<2x1x8xf32>
    %198 = vector.extract_strided_slice %196 {offsets = [0, 1, 0], sizes = [2, 1, 8], strides = [1, 1, 1]} : vector<2x16x8xf32> to vector<2x1x8xf32>
    %199 = vector.extract_strided_slice %196 {offsets = [0, 2, 0], sizes = [2, 1, 8], strides = [1, 1, 1]} : vector<2x16x8xf32> to vector<2x1x8xf32>
    %200 = vector.extract_strided_slice %196 {offsets = [0, 3, 0], sizes = [2, 1, 8], strides = [1, 1, 1]} : vector<2x16x8xf32> to vector<2x1x8xf32>
    %201 = vector.extract_strided_slice %196 {offsets = [0, 4, 0], sizes = [2, 1, 8], strides = [1, 1, 1]} : vector<2x16x8xf32> to vector<2x1x8xf32>
    %202 = vector.extract_strided_slice %196 {offsets = [0, 5, 0], sizes = [2, 1, 8], strides = [1, 1, 1]} : vector<2x16x8xf32> to vector<2x1x8xf32>
    %203 = vector.extract_strided_slice %196 {offsets = [0, 6, 0], sizes = [2, 1, 8], strides = [1, 1, 1]} : vector<2x16x8xf32> to vector<2x1x8xf32>
    %204 = vector.extract_strided_slice %196 {offsets = [0, 7, 0], sizes = [2, 1, 8], strides = [1, 1, 1]} : vector<2x16x8xf32> to vector<2x1x8xf32>
    %205 = vector.extract_strided_slice %196 {offsets = [0, 8, 0], sizes = [2, 1, 8], strides = [1, 1, 1]} : vector<2x16x8xf32> to vector<2x1x8xf32>
    %206 = vector.extract_strided_slice %196 {offsets = [0, 9, 0], sizes = [2, 1, 8], strides = [1, 1, 1]} : vector<2x16x8xf32> to vector<2x1x8xf32>
    %207 = vector.extract_strided_slice %196 {offsets = [0, 10, 0], sizes = [2, 1, 8], strides = [1, 1, 1]} : vector<2x16x8xf32> to vector<2x1x8xf32>
    %208 = vector.extract_strided_slice %196 {offsets = [0, 11, 0], sizes = [2, 1, 8], strides = [1, 1, 1]} : vector<2x16x8xf32> to vector<2x1x8xf32>
    %209 = vector.extract_strided_slice %196 {offsets = [0, 12, 0], sizes = [2, 1, 8], strides = [1, 1, 1]} : vector<2x16x8xf32> to vector<2x1x8xf32>
    %210 = vector.extract_strided_slice %196 {offsets = [0, 13, 0], sizes = [2, 1, 8], strides = [1, 1, 1]} : vector<2x16x8xf32> to vector<2x1x8xf32>
    %211 = vector.extract_strided_slice %196 {offsets = [0, 14, 0], sizes = [2, 1, 8], strides = [1, 1, 1]} : vector<2x16x8xf32> to vector<2x1x8xf32>
    %212 = vector.extract_strided_slice %196 {offsets = [0, 15, 0], sizes = [2, 1, 8], strides = [1, 1, 1]} : vector<2x16x8xf32> to vector<2x1x8xf32>
    %213 = tpu.concatenate %197, %198, %199, %200, %201, %202, %203, %204, %205, %206, %207, %208, %209, %210, %211, %212 in 2 : vector<2x1x8xf32>, vector<2x1x8xf32>, vector<2x1x8xf32>, vector<2x1x8xf32>, vector<2x1x8xf32>, vector<2x1x8xf32>, vector<2x1x8xf32>, vector<2x1x8xf32>, vector<2x1x8xf32>, vector<2x1x8xf32>, vector<2x1x8xf32>, vector<2x1x8xf32>, vector<2x1x8xf32>, vector<2x1x8xf32>, vector<2x1x8xf32>, vector<2x1x8xf32> -> vector<2x1x128xf32>
    %c0_72 = arith.constant 0 : index
    %c0_73 = arith.constant 0 : index
    %214 = vector.load %arg10[%c0_72, %c0_73] : memref<128x128xf32, #tpu.memory_space<vmem>>, vector<128x128xf32>
    %cst_74 = arith.constant dense<0.000000e+00> : vector<2x1x128xf32>
    %215 = tpu.matmul %213, %214, %cst_74 {dimension_numbers = #tpu.dot_dimension_numbers<[2], [0], [0, 1], [1], [0, 0, 0, 1, 1, 1], [], []>} : vector<2x1x128xf32>, vector<128x128xf32>, vector<2x1x128xf32> -> vector<2x1x128xf32>
    %c0_75 = arith.constant 0 : index
    %c0_76 = arith.constant 0 : index
    %216 = vector.load %arg11[%c0_75, %c0_76] : memref<1x128xf32, #tpu.memory_space<vmem>>, vector<1x128xf32>
    %217 = vector.shape_cast %216 : vector<1x128xf32> to vector<1x1x128xf32>
    %218 = vector.broadcast %217 : vector<1x1x128xf32> to vector<2x1x128xf32>
    %219 = arith.addf %215, %218 : vector<2x1x128xf32>
    %220 = vector.extract_strided_slice %219 {offsets = [0, 0, 0], sizes = [2, 1, 16], strides = [1, 1, 1]} : vector<2x1x128xf32> to vector<2x1x16xf32>
    %221 = arith.mulf %220, %220 : vector<2x1x16xf32>
    %cst_77 = arith.constant dense<0.000000e+00> : vector<2x1xf32>
    %222 = vector.multi_reduction <add>, %221, %cst_77 [2] : vector<2x1x16xf32> to vector<2x1xf32>
    %223 = vector.shape_cast %222 : vector<2x1xf32> to vector<2x1x1xf32>
    %cst_78 = arith.constant 1.000000e-24 : f32
    %224 = vector.broadcast %cst_78 : f32 to vector<2x1x1xf32>
    %225 = arith.maximumf %223, %224 : vector<2x1x1xf32>
    %226 = math.rsqrt %225 : vector<2x1x1xf32>
    %227 = vector.broadcast %226 : vector<2x1x1xf32> to vector<2x1x16xf32>
    %228 = arith.mulf %220, %227 : vector<2x1x16xf32>
    %229 = vector.extract_strided_slice %219 {offsets = [0, 0, 16], sizes = [2, 1, 16], strides = [1, 1, 1]} : vector<2x1x128xf32> to vector<2x1x16xf32>
    %230 = arith.mulf %229, %229 : vector<2x1x16xf32>
    %cst_79 = arith.constant dense<0.000000e+00> : vector<2x1xf32>
    %231 = vector.multi_reduction <add>, %230, %cst_79 [2] : vector<2x1x16xf32> to vector<2x1xf32>
    %232 = vector.shape_cast %231 : vector<2x1xf32> to vector<2x1x1xf32>
    %cst_80 = arith.constant 1.000000e-24 : f32
    %233 = vector.broadcast %cst_80 : f32 to vector<2x1x1xf32>
    %234 = arith.maximumf %232, %233 : vector<2x1x1xf32>
    %235 = math.rsqrt %234 : vector<2x1x1xf32>
    %236 = vector.broadcast %235 : vector<2x1x1xf32> to vector<2x1x16xf32>
    %237 = arith.mulf %229, %236 : vector<2x1x16xf32>
    %238 = vector.extract_strided_slice %219 {offsets = [0, 0, 32], sizes = [2, 1, 16], strides = [1, 1, 1]} : vector<2x1x128xf32> to vector<2x1x16xf32>
    %239 = arith.mulf %238, %238 : vector<2x1x16xf32>
    %cst_81 = arith.constant dense<0.000000e+00> : vector<2x1xf32>
    %240 = vector.multi_reduction <add>, %239, %cst_81 [2] : vector<2x1x16xf32> to vector<2x1xf32>
    %241 = vector.shape_cast %240 : vector<2x1xf32> to vector<2x1x1xf32>
    %cst_82 = arith.constant 1.000000e-24 : f32
    %242 = vector.broadcast %cst_82 : f32 to vector<2x1x1xf32>
    %243 = arith.maximumf %241, %242 : vector<2x1x1xf32>
    %244 = math.rsqrt %243 : vector<2x1x1xf32>
    %245 = vector.broadcast %244 : vector<2x1x1xf32> to vector<2x1x16xf32>
    %246 = arith.mulf %238, %245 : vector<2x1x16xf32>
    %247 = vector.extract_strided_slice %219 {offsets = [0, 0, 48], sizes = [2, 1, 16], strides = [1, 1, 1]} : vector<2x1x128xf32> to vector<2x1x16xf32>
    %248 = arith.mulf %247, %247 : vector<2x1x16xf32>
    %cst_83 = arith.constant dense<0.000000e+00> : vector<2x1xf32>
    %249 = vector.multi_reduction <add>, %248, %cst_83 [2] : vector<2x1x16xf32> to vector<2x1xf32>
    %250 = vector.shape_cast %249 : vector<2x1xf32> to vector<2x1x1xf32>
    %cst_84 = arith.constant 1.000000e-24 : f32
    %251 = vector.broadcast %cst_84 : f32 to vector<2x1x1xf32>
    %252 = arith.maximumf %250, %251 : vector<2x1x1xf32>
    %253 = math.rsqrt %252 : vector<2x1x1xf32>
    %254 = vector.broadcast %253 : vector<2x1x1xf32> to vector<2x1x16xf32>
    %255 = arith.mulf %247, %254 : vector<2x1x16xf32>
    %256 = vector.extract_strided_slice %219 {offsets = [0, 0, 64], sizes = [2, 1, 16], strides = [1, 1, 1]} : vector<2x1x128xf32> to vector<2x1x16xf32>
    %257 = arith.mulf %256, %256 : vector<2x1x16xf32>
    %cst_85 = arith.constant dense<0.000000e+00> : vector<2x1xf32>
    %258 = vector.multi_reduction <add>, %257, %cst_85 [2] : vector<2x1x16xf32> to vector<2x1xf32>
    %259 = vector.shape_cast %258 : vector<2x1xf32> to vector<2x1x1xf32>
    %cst_86 = arith.constant 1.000000e-24 : f32
    %260 = vector.broadcast %cst_86 : f32 to vector<2x1x1xf32>
    %261 = arith.maximumf %259, %260 : vector<2x1x1xf32>
    %262 = math.rsqrt %261 : vector<2x1x1xf32>
    %263 = vector.broadcast %262 : vector<2x1x1xf32> to vector<2x1x16xf32>
    %264 = arith.mulf %256, %263 : vector<2x1x16xf32>
    %265 = vector.extract_strided_slice %219 {offsets = [0, 0, 80], sizes = [2, 1, 16], strides = [1, 1, 1]} : vector<2x1x128xf32> to vector<2x1x16xf32>
    %266 = arith.mulf %265, %265 : vector<2x1x16xf32>
    %cst_87 = arith.constant dense<0.000000e+00> : vector<2x1xf32>
    %267 = vector.multi_reduction <add>, %266, %cst_87 [2] : vector<2x1x16xf32> to vector<2x1xf32>
    %268 = vector.shape_cast %267 : vector<2x1xf32> to vector<2x1x1xf32>
    %cst_88 = arith.constant 1.000000e-24 : f32
    %269 = vector.broadcast %cst_88 : f32 to vector<2x1x1xf32>
    %270 = arith.maximumf %268, %269 : vector<2x1x1xf32>
    %271 = math.rsqrt %270 : vector<2x1x1xf32>
    %272 = vector.broadcast %271 : vector<2x1x1xf32> to vector<2x1x16xf32>
    %273 = arith.mulf %265, %272 : vector<2x1x16xf32>
    %274 = vector.extract_strided_slice %219 {offsets = [0, 0, 96], sizes = [2, 1, 16], strides = [1, 1, 1]} : vector<2x1x128xf32> to vector<2x1x16xf32>
    %275 = arith.mulf %274, %274 : vector<2x1x16xf32>
    %cst_89 = arith.constant dense<0.000000e+00> : vector<2x1xf32>
    %276 = vector.multi_reduction <add>, %275, %cst_89 [2] : vector<2x1x16xf32> to vector<2x1xf32>
    %277 = vector.shape_cast %276 : vector<2x1xf32> to vector<2x1x1xf32>
    %cst_90 = arith.constant 1.000000e-24 : f32
    %278 = vector.broadcast %cst_90 : f32 to vector<2x1x1xf32>
    %279 = arith.maximumf %277, %278 : vector<2x1x1xf32>
    %280 = math.rsqrt %279 : vector<2x1x1xf32>
    %281 = vector.broadcast %280 : vector<2x1x1xf32> to vector<2x1x16xf32>
    %282 = arith.mulf %274, %281 : vector<2x1x16xf32>
    %283 = vector.extract_strided_slice %219 {offsets = [0, 0, 112], sizes = [2, 1, 16], strides = [1, 1, 1]} : vector<2x1x128xf32> to vector<2x1x16xf32>
    %284 = arith.mulf %283, %283 : vector<2x1x16xf32>
    %cst_91 = arith.constant dense<0.000000e+00> : vector<2x1xf32>
    %285 = vector.multi_reduction <add>, %284, %cst_91 [2] : vector<2x1x16xf32> to vector<2x1xf32>
    %286 = vector.shape_cast %285 : vector<2x1xf32> to vector<2x1x1xf32>
    %cst_92 = arith.constant 1.000000e-24 : f32
    %287 = vector.broadcast %cst_92 : f32 to vector<2x1x1xf32>
    %288 = arith.maximumf %286, %287 : vector<2x1x1xf32>
    %289 = math.rsqrt %288 : vector<2x1x1xf32>
    %290 = vector.broadcast %289 : vector<2x1x1xf32> to vector<2x1x16xf32>
    %291 = arith.mulf %283, %290 : vector<2x1x16xf32>
    %292 = tpu.concatenate %228, %237, %246, %255, %264, %273, %282, %291 in 2 : vector<2x1x16xf32>, vector<2x1x16xf32>, vector<2x1x16xf32>, vector<2x1x16xf32>, vector<2x1x16xf32>, vector<2x1x16xf32>, vector<2x1x16xf32>, vector<2x1x16xf32> -> vector<2x1x128xf32>
    %c0_93 = arith.constant 0 : index
    %c0_94 = arith.constant 0 : index
    %c0_95 = arith.constant 0 : index
    %293 = vector.load %arg14[%c0_93, %c0_94, %c0_95] : memref<2x1x128xf32, #tpu.memory_space<vmem>>, vector<2x1x128xf32>
    tpu.vector_store %arg14[%c0_93, %c0_94, %c0_95], %292 {strides = array<i32>} : memref<2x1x128xf32, #tpu.memory_space<vmem>>, vector<2x1x128xf32>,
    %c0_96 = arith.constant 0 : index
    %c0_97 = arith.constant 0 : index
    %294 = vector.load %arg12[%c0_96, %c0_97] : memref<128x8xf32, #tpu.memory_space<vmem>>, vector<128x8xf32>
    %cst_98 = arith.constant dense<0.000000e+00> : vector<2x1x8xf32>
    %295 = tpu.matmul %213, %294, %cst_98 {dimension_numbers = #tpu.dot_dimension_numbers<[2], [0], [0, 1], [1], [0, 0, 0, 1, 1, 1], [], []>} : vector<2x1x128xf32>, vector<128x8xf32>, vector<2x1x8xf32> -> vector<2x1x8xf32>
    %c0_99 = arith.constant 0 : index
    %c0_100 = arith.constant 0 : index
    %296 = vector.load %arg13[%c0_99, %c0_100] : memref<1x8xf32, #tpu.memory_space<vmem>>, vector<1x8xf32>
    %297 = vector.shape_cast %296 : vector<1x8xf32> to vector<1x1x8xf32>
    %298 = vector.broadcast %297 : vector<1x1x8xf32> to vector<2x1x8xf32>
    %299 = arith.addf %295, %298 : vector<2x1x8xf32>
    %cst_101 = arith.constant 0.000000e+00 : f32
    %300 = vector.broadcast %cst_101 : f32 to vector<2x1x8xf32>
    %301 = arith.subf %300, %299 : vector<2x1x8xf32>
    %302 = math.exp %301 : vector<2x1x8xf32>
    %cst_102 = arith.constant 1.000000e+00 : f32
    %303 = vector.broadcast %cst_102 : f32 to vector<2x1x8xf32>
    %304 = arith.addf %303, %302 : vector<2x1x8xf32>
    %cst_103 = arith.constant 2.000000e+01 : f32
    %305 = vector.broadcast %cst_103 : f32 to vector<2x1x8xf32>
    %306 = arith.divf %305, %304 : vector<2x1x8xf32>
    %c0_104 = arith.constant 0 : index
    %c0_105 = arith.constant 0 : index
    %c0_106 = arith.constant 0 : index
    %307 = vector.load %arg15[%c0_104, %c0_105, %c0_106] : memref<2x1x8xf32, #tpu.memory_space<vmem>>, vector<2x1x8xf32>
    tpu.vector_store %arg15[%c0_104, %c0_105, %c0_106], %306 {strides = array<i32>} : memref<2x1x8xf32, #tpu.memory_space<vmem>>, vector<2x1x8xf32>,
    return
  }
}

</mosaic_0001>

<llo_original>
// kernel: tpu_custom_call.1
$region0: #{tpu_custom_call.1}
  #allocation0 [shape = 'u32[]', space=smem, size = 0x4, offset = 0x4, fixed_abs, tag = 'smem constant byte address 0x4 - core index']
  #allocation1 [shape = 'u32[144,128]{1,0:T(1,128)}', space=vmem, size = 0x12000, scoped, tag = 'internal scratch']
  %s0 = inlined_call_operand.vmem [shape: f32[2,16], index: 0, kind: input, shape index: {}]
  %s1 = inlined_call_operand.vmem [shape: f32[3,3], index: 1, kind: input, shape index: {}]
  %s2 = inlined_call_operand.vmem [shape: f32[12,8], index: 2, kind: input, shape index: {}]
  %s3 = inlined_call_operand.vmem [shape: f32[1,8], index: 3, kind: input, shape index: {}]
  %s4 = inlined_call_operand.vmem [shape: f32[1,8], index: 4, kind: input, shape index: {}]
  %s5 = inlined_call_operand.vmem [shape: f32[1,8], index: 5, kind: input, shape index: {}]
  %s6 = inlined_call_operand.vmem [shape: f32[2,24,8], index: 6, kind: input, shape index: {}]
  %s7 = inlined_call_operand.vmem [shape: f32[2,1,8], index: 7, kind: input, shape index: {}]
  %s8 = inlined_call_operand.vmem [shape: f32[2,1,8], index: 8, kind: input, shape index: {}]
  %s9 = inlined_call_operand.vmem [shape: f32[2,1,8], index: 9, kind: input, shape index: {}]
  %s10 = inlined_call_operand.vmem [shape: f32[128,128], index: 10, kind: input, shape index: {}]
  %s11 = inlined_call_operand.vmem [shape: f32[1,128], index: 11, kind: input, shape index: {}]
  %s12 = inlined_call_operand.vmem [shape: f32[128,8], index: 12, kind: input, shape index: {}]
  %s13 = inlined_call_operand.vmem [shape: f32[1,8], index: 13, kind: input, shape index: {}]
  %s14 = inlined_call_operand.hbm [shape: f32[2,1,128], index: 14, kind: output, shape index: {0}]
  %s15 = inlined_call_operand.hbm [shape: f32[2,1,8], index: 15, kind: output, shape index: {1}]
  %16 = xla_tuple %s14, %s15
  %s17 = sld [smem:[#allocation0]]
  $region78: #{tpu_custom_call.1} parent=0
    _
  %s19 = ssub.s32 1, %s17
  %s20 = scalar_select 0, %s19, %s17
  $region1: #{tpu_custom_call.1} parent=0
    #allocation2 [shape = 'u8[2048]{0}', space=smem, size = 0x800, scoped, tag = 'input window, operand 1, single buffered']
    #allocation3 [shape = 's32[1]{0}', space=sflag, size = 0x4, scoped, tag = 'scoped memory for tpu_custom_call.1']
    #allocation4 [shape = 's32[1]{0}', space=sflag, size = 0x4, scoped, tag = 'scoped memory for tpu_custom_call.1']
    #allocation5 [shape = 'u8[1024]{0}', space=vmem, size = 0x400, scoped, tag = 'output window, operand 0, single buffered']
    #allocation6 [shape = 'u8[1024]{0}', space=vmem, size = 0x400, scoped, tag = 'output window, operand 1, single buffered']
    #allocation7 [shape = 's32[1]{0}', space=sflag, size = 0x4, scoped, tag = 'scoped memory for tpu_custom_call.1']
    %21 = vsyncpa [#allocation4], 0
    %22 = vsyncpa [#allocation3], 0
    %23 = vsyncpa [#allocation7], 0
    // Predicated region
    $region2: #{tpu_custom_call.1} parent=1 // pred_check
      _
    $region3: #{tpu_custom_call.1} parent=1 // pred_check_branch
      %25 = sbr.rel (0) target = $region5
    $region4: #{tpu_custom_call.1} parent=1 // pred_region
      _
    $region5: #{tpu_custom_call.1} parent=1 // pred_fallthru
      _
    // Predicated region
    $region6: #{tpu_custom_call.1} parent=1 // pred_check
      _
    $region7: #{tpu_custom_call.1} parent=1 // pred_check_branch
      %27 = sbr.rel (0) target = $region9
    $region8: #{tpu_custom_call.1} parent=1 // pred_region
      %s29 = ssub.s32 64, 64
      %30 = vsyncadd [#allocation4], %s29
      %s32 = sshll.u32 %s1, 4
      %s33 = int_to_ptr.vmem [resolvable:$true] %s32
      %35 = dma.vmem_to_smem %s33, 64, [#allocation2], [#allocation4]
    $region9: #{tpu_custom_call.1} parent=1 // pred_fallthru
      _
    // Predicated region
    $region10: #{tpu_custom_call.1} parent=1 // pred_check
      _
    $region11: #{tpu_custom_call.1} parent=1 // pred_check_branch
      %37 = sbr.rel (0) target = $region13
    $region12: #{tpu_custom_call.1} parent=1 // pred_region
      _
    $region13: #{tpu_custom_call.1} parent=1 // pred_fallthru
      _
    // Predicated region
    $region14: #{tpu_custom_call.1} parent=1 // pred_check
      _
    $region15: #{tpu_custom_call.1} parent=1 // pred_check_branch
      %39 = sbr.rel (0) target = $region17
    $region16: #{tpu_custom_call.1} parent=1 // pred_region
      _
    $region17: #{tpu_custom_call.1} parent=1 // pred_fallthru
      _
    // Predicated region
    $region18: #{tpu_custom_call.1} parent=1 // pred_check
      _
    $region19: #{tpu_custom_call.1} parent=1 // pred_check_branch
      %41 = sbr.rel (0) target = $region21
    $region20: #{tpu_custom_call.1} parent=1 // pred_region
      _
    $region21: #{tpu_custom_call.1} parent=1 // pred_fallthru
      _
    // Predicated region
    $region22: #{tpu_custom_call.1} parent=1 // pred_check
      _
    $region23: #{tpu_custom_call.1} parent=1 // pred_check_branch
      %43 = sbr.rel (0) target = $region25
    $region24: #{tpu_custom_call.1} parent=1 // pred_region
      _
    $region25: #{tpu_custom_call.1} parent=1 // pred_fallthru
      _
    // Predicated region
    $region26: #{tpu_custom_call.1} parent=1 // pred_check
      _
    $region27: #{tpu_custom_call.1} parent=1 // pred_check_branch
      %45 = sbr.rel (0) target = $region29
    $region28: #{tpu_custom_call.1} parent=1 // pred_region
      _
    $region29: #{tpu_custom_call.1} parent=1 // pred_fallthru
      _
    // Predicated region
    $region30: #{tpu_custom_call.1} parent=1 // pred_check
      _
    $region31: #{tpu_custom_call.1} parent=1 // pred_check_branch
      %47 = sbr.rel (0) target = $region33
    $region32: #{tpu_custom_call.1} parent=1 // pred_region
      _
    $region33: #{tpu_custom_call.1} parent=1 // pred_fallthru
      _
    // Predicated region
    $region34: #{tpu_custom_call.1} parent=1 // pred_check
      _
    $region35: #{tpu_custom_call.1} parent=1 // pred_check_branch
      %49 = sbr.rel (0) target = $region37
    $region36: #{tpu_custom_call.1} parent=1 // pred_region
      _
    $region37: #{tpu_custom_call.1} parent=1 // pred_fallthru
      _
    // Predicated region
    $region38: #{tpu_custom_call.1} parent=1 // pred_check
      _
    $region39: #{tpu_custom_call.1} parent=1 // pred_check_branch
      %51 = sbr.rel (0) target = $region41
    $region40: #{tpu_custom_call.1} parent=1 // pred_region
      _
    $region41: #{tpu_custom_call.1} parent=1 // pred_fallthru
      _
    // Predicated region
    $region42: #{tpu_custom_call.1} parent=1 // pred_check
      _
    $region43: #{tpu_custom_call.1} parent=1 // pred_check_branch
      %53 = sbr.rel (0) target = $region45
    $region44: #{tpu_custom_call.1} parent=1 // pred_region
      _
    $region45: #{tpu_custom_call.1} parent=1 // pred_fallthru
      _
    // Predicated region
    $region46: #{tpu_custom_call.1} parent=1 // pred_check
      _
    $region47: #{tpu_custom_call.1} parent=1 // pred_check_branch
      %55 = sbr.rel (0) target = $region49
    $region48: #{tpu_custom_call.1} parent=1 // pred_region
      _
    $region49: #{tpu_custom_call.1} parent=1 // pred_fallthru
      _
    // Predicated region
    $region50: #{tpu_custom_call.1} parent=1 // pred_check
      _
    $region51: #{tpu_custom_call.1} parent=1 // pred_check_branch
      %57 = sbr.rel (0) target = $region53
    $region52: #{tpu_custom_call.1} parent=1 // pred_region
      _
    $region53: #{tpu_custom_call.1} parent=1 // pred_fallthru
      _
    // Predicated region
    $region54: #{tpu_custom_call.1} parent=1 // pred_check
      _
    $region55: #{tpu_custom_call.1} parent=1 // pred_check_branch
      %59 = sbr.rel (0) target = $region57
    $region56: #{tpu_custom_call.1} parent=1 // pred_region
      _
    $region57: #{tpu_custom_call.1} parent=1 // pred_fallthru
      _
    // Predicated region
    $region58: #{tpu_custom_call.1} parent=1 // pred_check
      _
    $region59: #{tpu_custom_call.1} parent=1 // pred_check_branch
      %61 = sbr.rel (0) target = $region61
    $region60: #{tpu_custom_call.1} parent=1 // pred_region
      %62 = dma.done [#allocation4], 64
    $region61: #{tpu_custom_call.1} parent=1 // pred_fallthru
      _
    %63 = sfence
    %v64 = vld [vmem:[%s0] sm:$0x3]
    %s65 = sld [smem:[#allocation2]]
    %67 = vrot.lane.b32.xlu0 %v64, 113
    %v68 = vpop.permute.xlu0 %67
    %70 = vrot.lane.b32.xlu0 %v64, 1
    %v71 = vpop.permute.xlu0 %70
    %vm73 = vcmask 7168
    %v74 = vsel %vm73, %v68, %v71
    %v75 = vstv %s65
    %v76 = vmul.f32 %v75, %v74
    %s77 = sld [smem:[#allocation2 + $0x1]]
    %v78 = vstv %s77
    %v79 = vmul.f32 %v78, %v64
    %v80 = vadd.f32 %v76, %v79
    %s81 = sld [smem:[#allocation2 + $0x2]]
    %82 = vrot.lane.b32.xlu0 %v64, 127
    %v83 = vpop.permute.xlu0 %82
    %85 = vrot.lane.b32.xlu0 %v64, 15
    %v86 = vpop.permute.xlu0 %85
    %vm88 = vcmask 121856
    %v89 = vsel %vm88, %v83, %v86
    %v90 = vstv %s81
    %v91 = vmul.f32 %v90, %v89
    %v92 = vadd.f32 %v80, %v91
    %s93 = sld [smem:[#allocation2 + $0x80]]
    %94 = vrot.lane.b32.xlu0 %v64, 114
    %v95 = vpop.permute.xlu0 %94
    %97 = vrot.lane.b32.xlu0 %v64, 2
    %v98 = vpop.permute.xlu0 %97
    %vm100 = vcmask 15360
    %v101 = vsel %vm100, %v95, %v98
    %v102 = vstv %s93
    %v103 = vmul.f32 %v102, %v101
    %s104 = sld [smem:[#allocation2 + $0x81]]
    %v105 = vstv %s104
    %v106 = vmul.f32 %v105, %v64
    %v107 = vadd.f32 %v103, %v106
    %s108 = sld [smem:[#allocation2 + $0x82]]
    %109 = vrot.lane.b32.xlu0 %v64, 126
    %v110 = vpop.permute.xlu0 %109
    %112 = vrot.lane.b32.xlu0 %v64, 14
    %v113 = vpop.permute.xlu0 %112
    %vm115 = vcmask 113664
    %v116 = vsel %vm115, %v110, %v113
    %v117 = vstv %s108
    %v118 = vmul.f32 %v117, %v116
    %v119 = vadd.f32 %v107, %v118
    %s120 = sld [smem:[#allocation2 + $0x100]]
    %121 = vrot.lane.b32.xlu0 %v64, 116
    %v122 = vpop.permute.xlu0 %121
    %124 = vrot.lane.b32.xlu0 %v64, 4
    %v125 = vpop.permute.xlu0 %124
    %vm127 = vcmask 31744
    %v128 = vsel %vm127, %v122, %v125
    %v129 = vstv %s120
    %v130 = vmul.f32 %v129, %v128
    %s131 = sld [smem:[#allocation2 + $0x101]]
    %v132 = vstv %s131
    %v133 = vmul.f32 %v132, %v64
    %v134 = vadd.f32 %v130, %v133
    %s135 = sld [smem:[#allocation2 + $0x102]]
    %136 = vrot.lane.b32.xlu0 %v64, 124
    %v137 = vpop.permute.xlu0 %136
    %139 = vrot.lane.b32.xlu0 %v64, 12
    %v140 = vpop.permute.xlu0 %139
    %vm142 = vcmask 97280
    %v143 = vsel %vm142, %v137, %v140
    %v144 = vstv %s135
    %v145 = vmul.f32 %v144, %v143
    %v146 = vadd.f32 %v134, %v145
    %v147 = vlaneseq
    %v148 = vshrl.u32 %v147, 7
    %v149 = vsub.s32 0, %v148
    %v150 = vrot.slane %v92, %v149
    %152 = vbcast.lane.b32.xlu0 %v150, 256
    %v153 = vpop.permute.xlu0 %152
    %s155 = sor.u32 256, 8
    %156 = vbcast.lane.b32.xlu0 %v150, %s155
    %v157 = vpop.permute.xlu0 %156
    %v158 = vlaneseq
    %v159 = vshrl.u32 %v158, 7
    %v160 = vsub.s32 1, %v159
    %v161 = vrot.slane %v92, %v160
    %163 = vbcast.lane.b32.xlu0 %v161, 256
    %v164 = vpop.permute.xlu0 %163
    %s166 = sor.u32 256, 8
    %167 = vbcast.lane.b32.xlu0 %v161, %s166
    %v168 = vpop.permute.xlu0 %167
    %v169 = vlaneseq
    %v170 = vshrl.u32 %v169, 7
    %v171 = vsub.s32 0, %v170
    %v172 = vrot.slane %v119, %v171
    %174 = vbcast.lane.b32.xlu0 %v172, 256
    %v175 = vpop.permute.xlu0 %174
    %s177 = sor.u32 256, 8
    %178 = vbcast.lane.b32.xlu0 %v172, %s177
    %v179 = vpop.permute.xlu0 %178
    %v180 = vlaneseq
    %v181 = vshrl.u32 %v180, 7
    %v182 = vsub.s32 1, %v181
    %v183 = vrot.slane %v119, %v182
    %185 = vbcast.lane.b32.xlu0 %v183, 256
    %v186 = vpop.permute.xlu0 %185
    %s188 = sor.u32 256, 8
    %189 = vbcast.lane.b32.xlu0 %v183, %s188
    %v190 = vpop.permute.xlu0 %189
    %v191 = vlaneseq
    %v192 = vshrl.u32 %v191, 7
    %v193 = vsub.s32 0, %v192
    %v194 = vrot.slane %v146, %v193
    %196 = vbcast.lane.b32.xlu0 %v194, 256
    %v197 = vpop.permute.xlu0 %196
    %s199 = sor.u32 256, 8
    %200 = vbcast.lane.b32.xlu0 %v194, %s199
    %v201 = vpop.permute.xlu0 %200
    %v202 = vlaneseq
    %v203 = vshrl.u32 %v202, 7
    %v204 = vsub.s32 1, %v203
    %v205 = vrot.slane %v146, %v204
    %207 = vbcast.lane.b32.xlu0 %v205, 256
    %v208 = vpop.permute.xlu0 %207
    %s210 = sor.u32 256, 8
    %211 = vbcast.lane.b32.xlu0 %v205, %s210
    %v212 = vpop.permute.xlu0 %211
    %v213 = vlaneseq
    %v214 = vshrl.u32 %v213, 7
    %v215 = vsub.s32 0, %v214
    %v216 = vrot.slane %v64, %v215
    %218 = vbcast.lane.b32.xlu0 %v216, 256
    %v219 = vpop.permute.xlu0 %218
    %s221 = sor.u32 256, 8
    %222 = vbcast.lane.b32.xlu0 %v216, %s221
    %v223 = vpop.permute.xlu0 %222
    %v224 = vlaneseq
    %v225 = vshrl.u32 %v224, 7
    %v226 = vsub.s32 1, %v225
    %v227 = vrot.slane %v64, %v226
    %229 = vbcast.lane.b32.xlu0 %v227, 256
    %v230 = vpop.permute.xlu0 %229
    %s232 = sor.u32 256, 8
    %233 = vbcast.lane.b32.xlu0 %v227, %s232
    %v234 = vpop.permute.xlu0 %233
    %v235 = vsel %vm73, %v153, %v175
    %v236 = vsel %vm73, %v157, %v179
    %v237 = vsel %vm73, %v164, %v186
    %v238 = vsel %vm73, %v168, %v190
    %v239 = vsel %vm100, %v235, %v197
    %v240 = vsel %vm100, %v236, %v201
    %v241 = vsel %vm100, %v237, %v208
    %v242 = vsel %vm100, %v238, %v212
    %vm243 = vcmask 23552
    %v244 = vsel %vm243, %v239, %v219
    %v245 = vsel %vm243, %v240, %v223
    %v246 = vsel %vm243, %v241, %v230
    %v247 = vsel %vm243, %v242, %v234
    %v250 = vrot.slane %v245, 7
    %v251 = vrot.slane %v247, 7
    %vm256 = vcmask 1040384
    %v257 = vrot.slane %v244, 7
    %v258 = vsel %vm256, %v257, %v250
    %v259 = vrot.slane %v246, 7
    %v260 = vsel %vm256, %v259, %v251
    %v265 = vsel %vm256, %v250, %v257
    %v266 = vsel %vm256, %v251, %v259
    %vm267 = vcmask 1046528
    %v268 = vrot.slane %v244, 1
    %v269 = vrot.slane %v245, 1
    %v270 = vsel %vm267, %v268, %v269
    %v271 = vrot.slane %v246, 1
    %v272 = vrot.slane %v247, 1
    %v273 = vsel %vm267, %v271, %v272
    %v278 = vsel %vm267, %v269, %v268
    %v279 = vsel %vm267, %v272, %v271
    %280 = vrot.lane.b32.xlu0 %v244, 4
    %v281 = vpop.permute.xlu0 %280
    %282 = vrot.lane.b32.xlu0 %v245, 4
    %v283 = vpop.permute.xlu0 %282
    %284 = vrot.lane.b32.xlu0 %v246, 4
    %v285 = vpop.permute.xlu0 %284
    %286 = vrot.lane.b32.xlu0 %v247, 4
    %v287 = vpop.permute.xlu0 %286
    %294 = vrot.lane.b32.xlu0 %v270, 8
    %v295 = vpop.permute.xlu0 %294
    %296 = vrot.lane.b32.xlu0 %v278, 8
    %v297 = vpop.permute.xlu0 %296
    %298 = vrot.lane.b32.xlu0 %v273, 8
    %v299 = vpop.permute.xlu0 %298
    %300 = vrot.lane.b32.xlu0 %v279, 8
    %v301 = vpop.permute.xlu0 %300
    %v306 = vsel %vm127, %v265, %v281
    %v307 = vsel %vm127, %v258, %v283
    %v308 = vsel %vm127, %v266, %v285
    %v309 = vsel %vm127, %v260, %v287
    %vm310 = vcmask 64512
    %v311 = vsel %vm310, %v306, %v295
    %v312 = vsel %vm310, %v307, %v297
    %v313 = vsel %vm310, %v308, %v299
    %v314 = vsel %vm310, %v309, %v301
    %v315 = vld [vmem:[%s2] sm:$0xff]
    %v316 = vld [vmem:[%s2 + $0x8] sm:$0xf]
    %v317 = vld [vmem:[%s3] sm:$0x1]
    %v319 = vlaneseq
    %v320 = vshrl.u32 %v319, 7
    %v321 = vsub.s32 0, %v320
    %v322 = vrot.slane %v317, %v321
    %v325 = vsel %vm142, %v311, 0
    %v328 = vsel %vm142, %v312, 0
    %v331 = vsel %vm142, %v313, 0
    %v334 = vsel %vm142, %v314, 0
    %vm336 = vcmask 1043456
    %v338 = vsel %vm336, %v316, 0
    %340 = vmatprep.subr.mxu0 0.0
    %341 = vmatpush1.msra.mxu0 %v315
    %342 = vmatprep.subr.mxu0 0.0
    %343 = vmatpush1.msra.mxu0 %v338
    %344 = vmatprep.subr.mxu0 0.0
    %345 = vmatpush1.msra.mxu0 0.0
    %346 = vmatprep.subr.mxu0 0.0
    %347 = vmatpush1.msra.mxu0 0.0
    %348 = vmatprep.subr.mxu0 0.0
    %349 = vmatpush1.msra.mxu0 0.0
    %350 = vmatprep.subr.mxu0 0.0
    %351 = vmatpush1.msra.mxu0 0.0
    %352 = vmatprep.subr.mxu0 0.0
    %353 = vmatpush1.msra.mxu0 0.0
    %354 = vmatprep.subr.mxu0 0.0
    %355 = vmatpush1.msra.mxu0 0.0
    %356 = vmatprep.subr.mxu0 0.0
    %357 = vmatpush1.msra.mxu0 0.0
    %358 = vmatprep.subr.mxu0 0.0
    %359 = vmatpush1.msra.mxu0 0.0
    %360 = vmatprep.subr.mxu0 0.0
    %361 = vmatpush1.msra.mxu0 0.0
    %362 = vmatprep.subr.mxu0 0.0
    %363 = vmatpush1.msra.mxu0 0.0
    %364 = vmatprep.subr.mxu0 0.0
    %365 = vmatpush1.msra.mxu0 0.0
    %366 = vmatprep.subr.mxu0 0.0
    %367 = vmatpush1.msra.mxu0 0.0
    %368 = vmatprep.subr.mxu0 0.0
    %369 = vmatpush1.msra.mxu0 0.0
    %370 = vmatprep.subr.mxu0 0.0
    %371 = vmatpush1.msra.mxu0 0.0
    %372 = vmatprep.subr.mxu0 0.0
    %373 = vmatpush1.msra.mxu0 0.0
    %374 = vmatprep.subr.mxu0 0.0
    %375 = vmatpush1.msra.mxu0 0.0
    %376 = vmatprep.subr.mxu0 0.0
    %377 = vmatpush1.msra.mxu0 0.0
    %378 = vmatprep.subr.mxu0 0.0
    %379 = vmatpush1.msra.mxu0 0.0
    %380 = vmatprep.subr.mxu0 0.0
    %381 = vmatpush1.msra.mxu0 0.0
    %382 = vmatprep.subr.mxu0 0.0
    %383 = vmatpush1.msra.mxu0 0.0
    %384 = vmatprep.subr.mxu0 0.0
    %385 = vmatpush1.msra.mxu0 0.0
    %386 = vmatprep.subr.mxu0 0.0
    %387 = vmatpush1.msra.mxu0 0.0
    %388 = vmatprep.subr.mxu0 0.0
    %389 = vmatpush1.msra.mxu0 0.0
    %390 = vmatprep.subr.mxu0 0.0
    %391 = vmatpush1.msra.mxu0 0.0
    %392 = vmatprep.subr.mxu0 0.0
    %393 = vmatpush1.msra.mxu0 0.0
    %394 = vmatprep.subr.mxu0 0.0
    %395 = vmatpush1.msra.mxu0 0.0
    %396 = vmatprep.subr.mxu0 0.0
    %397 = vmatpush1.msra.mxu0 0.0
    %398 = vmatprep.subr.mxu0 0.0
    %399 = vmatpush1.msra.mxu0 0.0
    %400 = vmatprep.subr.mxu0 0.0
    %401 = vmatpush1.msra.mxu0 0.0
    %402 = vmatprep.subr.mxu0 0.0
    %403 = vmatpush1.msra.mxu0 0.0
    %404 = vmatprep.mubr.f32.mxu0 0.0
    %405 = vmatmul.mubr.f32.gmra.mrb[0].mxu0 %v325
    %v406 = vpop.f32.mrb[0].mxu0
    %v407 = vadd.f32 %v322, %v406
    %v408 = vpop.f32.mrb[0].mxu0
    %409 = vmatprep.mubr.f32.mxu0 0.0
    %410 = vmatmul.mubr.f32.gmra.mrb[0].mxu0 %v328
    %v411 = vpop.f32.mrb[0].mxu0
    %v412 = vadd.f32 %v322, %v411
    %v413 = vpop.f32.mrb[0].mxu0
    %414 = vmatprep.mubr.f32.mxu0 0.0
    %415 = vmatmul.mubr.f32.gmra.mrb[0].mxu0 %v331
    %v416 = vpop.f32.mrb[0].mxu0
    %v417 = vadd.f32 %v322, %v416
    %v418 = vpop.f32.mrb[0].mxu0
    %419 = vmatprep.mubr.f32.mxu0 0.0
    %420 = vmatmul.mubr.f32.gmra.mrb[0].mxu0 %v334
    %v421 = vpop.f32.mrb[0].mxu0
    %v422 = vadd.f32 %v322, %v421
    %v423 = vpop.f32.mrb[0].mxu0
    %424 = vdwg.mxu0
    %v425 = vld [vmem:[%s4] sm:$0x1]
    %v426 = vld [vmem:[%s5] sm:$0x1]
    %v427 = vsel %vm310, %v407, 0.0
    %v428 = vsel %vm310, %v412, 0.0
    %v429 = vadd.f32 %v427, %v428
    %v430 = vsel %vm310, %v417, 0.0
    %v431 = vadd.f32 %v429, %v430
    %v432 = vsel %vm310, %v422, 0.0
    %v433 = vadd.f32 %v431, %v432
    %v434 = vrot.slane %v433, 4
    %v435 = vadd.f32 %v433, %v434
    %v436 = vrot.slane %v435, 2
    %v437 = vadd.f32 %v435, %v436
    %v438 = vrot.slane %v437, 1
    %v439 = vadd.f32 %v437, %v438
    %v440 = vrcp.pop 32.0
    %v441 = vmul.f32 %v439, %v440
    %v442 = vmul.f32 %v407, %v407
    %v443 = vmul.f32 %v412, %v412
    %v444 = vmul.f32 %v417, %v417
    %v445 = vmul.f32 %v422, %v422
    %v446 = vsel %vm310, %v442, 0.0
    %v447 = vsel %vm310, %v443, 0.0
    %v448 = vadd.f32 %v446, %v447
    %v449 = vsel %vm310, %v444, 0.0
    %v450 = vadd.f32 %v448, %v449
    %v451 = vsel %vm310, %v445, 0.0
    %v452 = vadd.f32 %v450, %v451
    %v453 = vrot.slane %v452, 4
    %v454 = vadd.f32 %v452, %v453
    %v455 = vrot.slane %v454, 2
    %v456 = vadd.f32 %v454, %v455
    %v457 = vrot.slane %v456, 1
    %v458 = vadd.f32 %v456, %v457
    %v459 = vmul.f32 %v458, %v440
    %v460 = vmul.f32 %v441, %v441
    %v461 = vsub.f32 %v459, %v460
    %v462 = vsub.f32 %v407, %v441
    %v463 = vsub.f32 %v412, %v441
    %v464 = vsub.f32 %v417, %v441
    %v465 = vsub.f32 %v422, %v441
    %v466 = vadd.f32 %v461, 1e-05
    %v467 = vrsqrt.pop %v466
    %v468 = vmul.f32 %v462, %v467
    %v469 = vmul.f32 %v463, %v467
    %v470 = vmul.f32 %v464, %v467
    %v471 = vmul.f32 %v465, %v467
    %v473 = vlaneseq
    %v474 = vshrl.u32 %v473, 7
    %v475 = vsub.s32 0, %v474
    %v476 = vrot.slane %v425, %v475
    %v478 = vmul.f32 %v468, %v476
    %v479 = vmul.f32 %v469, %v476
    %v480 = vmul.f32 %v470, %v476
    %v481 = vmul.f32 %v471, %v476
    %v483 = vlaneseq
    %v484 = vshrl.u32 %v483, 7
    %v485 = vsub.s32 0, %v484
    %v486 = vrot.slane %v426, %v485
    %v488 = vadd.f32 %v478, %v486
    %v489 = vadd.f32 %v479, %v486
    %v490 = vadd.f32 %v480, %v486
    %v491 = vadd.f32 %v481, %v486
    %vm492 = vcmp.ge.f32.partialorder %v488, 0.0
    %vm493 = vcmp.ge.f32.partialorder %v489, 0.0
    %vm494 = vcmp.ge.f32.partialorder %v490, 0.0
    %vm495 = vcmp.ge.f32.partialorder %v491, 0.0
    %v496 = vmul.f32 %v488, 0.01
    %v497 = vmul.f32 %v489, 0.01
    %v498 = vmul.f32 %v490, 0.01
    %v499 = vmul.f32 %v491, 0.01
    %v500 = vsel %vm492, %v488, %v496
    %v501 = vsel %vm493, %v489, %v497
    %v502 = vsel %vm494, %v490, %v498
    %v503 = vsel %vm495, %v491, %v499
    %v506 = vrot.slane %v501, 7
    %v507 = vrot.slane %v503, 7
    %v512 = vrot.slane %v500, 7
    %v513 = vsel %vm256, %v512, %v506
    %v514 = vrot.slane %v502, 7
    %v515 = vsel %vm256, %v514, %v507
    %v520 = vsel %vm256, %v506, %v512
    %v521 = vsel %vm256, %v507, %v514
    %v522 = vrot.slane %v500, 1
    %v523 = vrot.slane %v501, 1
    %v524 = vsel %vm267, %v522, %v523
    %v525 = vrot.slane %v502, 1
    %v526 = vrot.slane %v503, 1
    %v527 = vsel %vm267, %v525, %v526
    %v532 = vsel %vm267, %v523, %v522
    %v533 = vsel %vm267, %v526, %v525
    %534 = vrot.lane.b32.xlu0 %v500, 8
    %v535 = vpop.permute.xlu0 %534
    %536 = vrot.lane.b32.xlu0 %v501, 8
    %v537 = vpop.permute.xlu0 %536
    %538 = vrot.lane.b32.xlu0 %v502, 8
    %v539 = vpop.permute.xlu0 %538
    %540 = vrot.lane.b32.xlu0 %v503, 8
    %v541 = vpop.permute.xlu0 %540
    %548 = vrot.lane.b32.xlu0 %v524, 16
    %v549 = vpop.permute.xlu0 %548
    %550 = vrot.lane.b32.xlu0 %v532, 16
    %v551 = vpop.permute.xlu0 %550
    %552 = vrot.lane.b32.xlu0 %v527, 16
    %v553 = vpop.permute.xlu0 %552
    %554 = vrot.lane.b32.xlu0 %v533, 16
    %v555 = vpop.permute.xlu0 %554
    %v560 = vsel %vm310, %v520, %v535
    %v561 = vsel %vm310, %v513, %v537
    %v562 = vsel %vm310, %v521, %v539
    %v563 = vsel %vm310, %v515, %v541
    %vm564 = vcmask 130048
    %v565 = vsel %vm564, %v560, %v549
    %v566 = vsel %vm564, %v561, %v551
    %v567 = vsel %vm564, %v562, %v553
    %v568 = vsel %vm564, %v563, %v555
    %v569 = vld [vmem:[%s6] sm:$0xff]
    %v570 = vld [vmem:[%s6 + $0x8] sm:$0xff]
    %v571 = vld [vmem:[%s6 + $0x10] sm:$0xff]
    %v572 = vld [vmem:[%s7] sm:$0x1]
    %v574 = vlaneseq
    %v575 = vshrl.u32 %v574, 7
    %v576 = vsub.s32 0, %v575
    %v577 = vrot.slane %v572, %v576
    %vm579 = vcmask 195584
    %v581 = vsel %vm579, %v565, 0
    %v584 = vsel %vm579, %v566, 0
    %v587 = vsel %vm579, %v567, 0
    %v590 = vsel %vm579, %v568, 0
    %592 = vmatprep.subr.mxu0 0.0
    %593 = vmatpush1.msra.mxu0 %v569
    %594 = vmatprep.subr.mxu0 0.0
    %595 = vmatpush1.msra.mxu0 %v570
    %596 = vmatprep.subr.mxu0 0.0
    %597 = vmatpush1.msra.mxu0 %v571
    %598 = vmatprep.subr.mxu0 0.0
    %599 = vmatpush1.msra.mxu0 0.0
    %600 = vmatprep.subr.mxu0 0.0
    %601 = vmatpush1.msra.mxu0 0.0
    %602 = vmatprep.subr.mxu0 0.0
    %603 = vmatpush1.msra.mxu0 0.0
    %604 = vmatprep.subr.mxu0 0.0
    %605 = vmatpush1.msra.mxu0 0.0
    %606 = vmatprep.subr.mxu0 0.0
    %607 = vmatpush1.msra.mxu0 0.0
    %608 = vmatprep.subr.mxu0 0.0
    %609 = vmatpush1.msra.mxu0 0.0
    %610 = vmatprep.subr.mxu0 0.0
    %611 = vmatpush1.msra.mxu0 0.0
    %612 = vmatprep.subr.mxu0 0.0
    %613 = vmatpush1.msra.mxu0 0.0
    %614 = vmatprep.subr.mxu0 0.0
    %615 = vmatpush1.msra.mxu0 0.0
    %616 = vmatprep.subr.mxu0 0.0
    %617 = vmatpush1.msra.mxu0 0.0
    %618 = vmatprep.subr.mxu0 0.0
    %619 = vmatpush1.msra.mxu0 0.0
    %620 = vmatprep.subr.mxu0 0.0
    %621 = vmatpush1.msra.mxu0 0.0
    %622 = vmatprep.subr.mxu0 0.0
    %623 = vmatpush1.msra.mxu0 0.0
    %624 = vmatprep.subr.mxu0 0.0
    %625 = vmatpush1.msra.mxu0 0.0
    %626 = vmatprep.subr.mxu0 0.0
    %627 = vmatpush1.msra.mxu0 0.0
    %628 = vmatprep.subr.mxu0 0.0
    %629 = vmatpush1.msra.mxu0 0.0
    %630 = vmatprep.subr.mxu0 0.0
    %631 = vmatpush1.msra.mxu0 0.0
    %632 = vmatprep.subr.mxu0 0.0
    %633 = vmatpush1.msra.mxu0 0.0
    %634 = vmatprep.subr.mxu0 0.0
    %635 = vmatpush1.msra.mxu0 0.0
    %636 = vmatprep.subr.mxu0 0.0
    %637 = vmatpush1.msra.mxu0 0.0
    %638 = vmatprep.subr.mxu0 0.0
    %639 = vmatpush1.msra.mxu0 0.0
    %640 = vmatprep.subr.mxu0 0.0
    %641 = vmatpush1.msra.mxu0 0.0
    %642 = vmatprep.subr.mxu0 0.0
    %643 = vmatpush1.msra.mxu0 0.0
    %644 = vmatprep.subr.mxu0 0.0
    %645 = vmatpush1.msra.mxu0 0.0
    %646 = vmatprep.subr.mxu0 0.0
    %647 = vmatpush1.msra.mxu0 0.0
    %648 = vmatprep.subr.mxu0 0.0
    %649 = vmatpush1.msra.mxu0 0.0
    %650 = vmatprep.subr.mxu0 0.0
    %651 = vmatpush1.msra.mxu0 0.0
    %652 = vmatprep.subr.mxu0 0.0
    %653 = vmatpush1.msra.mxu0 0.0
    %654 = vmatprep.subr.mxu0 0.0
    %655 = vmatpush1.msra.mxu0 0.0
    %656 = vmatprep.mubr.f32.mxu0 0.0
    %657 = vmatmul.mubr.f32.gmra.mrb[0].mxu0 %v581
    %v658 = vpop.f32.mrb[0].mxu0
    %v659 = vadd.f32 %v577, %v658
    %v660 = vpop.f32.mrb[0].mxu0
    %661 = vmatprep.mubr.f32.mxu0 0.0
    %662 = vmatmul.mubr.f32.gmra.mrb[0].mxu0 %v584
    %v663 = vpop.f32.mrb[0].mxu0
    %v664 = vadd.f32 %v577, %v663
    %v665 = vpop.f32.mrb[0].mxu0
    %666 = vmatprep.mubr.f32.mxu0 0.0
    %667 = vmatmul.mubr.f32.gmra.mrb[0].mxu0 %v587
    %v668 = vpop.f32.mrb[0].mxu0
    %v669 = vadd.f32 %v577, %v668
    %v670 = vpop.f32.mrb[0].mxu0
    %671 = vmatprep.mubr.f32.mxu0 0.0
    %672 = vmatmul.mubr.f32.gmra.mrb[0].mxu0 %v590
    %v673 = vpop.f32.mrb[0].mxu0
    %v674 = vadd.f32 %v577, %v673
    %v675 = vpop.f32.mrb[0].mxu0
    %676 = vdwg.mxu0
    %v677 = vld [vmem:[%s8] sm:$0x1]
    %v678 = vld [vmem:[%s9] sm:$0x1]
    %v679 = vsel %vm310, %v659, 0.0
    %v680 = vsel %vm310, %v664, 0.0
    %v681 = vadd.f32 %v679, %v680
    %v682 = vsel %vm310, %v669, 0.0
    %v683 = vadd.f32 %v681, %v682
    %v684 = vsel %vm310, %v674, 0.0
    %v685 = vadd.f32 %v683, %v684
    %v686 = vrot.slane %v685, 4
    %v687 = vadd.f32 %v685, %v686
    %v688 = vrot.slane %v687, 2
    %v689 = vadd.f32 %v687, %v688
    %v690 = vrot.slane %v689, 1
    %v691 = vadd.f32 %v689, %v690
    %v692 = vmul.f32 %v691, %v440
    %v693 = vmul.f32 %v659, %v659
    %v694 = vmul.f32 %v664, %v664
    %v695 = vmul.f32 %v669, %v669
    %v696 = vmul.f32 %v674, %v674
    %v697 = vsel %vm310, %v693, 0.0
    %v698 = vsel %vm310, %v694, 0.0
    %v699 = vadd.f32 %v697, %v698
    %v700 = vsel %vm310, %v695, 0.0
    %v701 = vadd.f32 %v699, %v700
    %v702 = vsel %vm310, %v696, 0.0
    %v703 = vadd.f32 %v701, %v702
    %v704 = vrot.slane %v703, 4
    %v705 = vadd.f32 %v703, %v704
    %v706 = vrot.slane %v705, 2
    %v707 = vadd.f32 %v705, %v706
    %v708 = vrot.slane %v707, 1
    %v709 = vadd.f32 %v707, %v708
    %v710 = vmul.f32 %v709, %v440
    %v711 = vmul.f32 %v692, %v692
    %v712 = vsub.f32 %v710, %v711
    %v713 = vsub.f32 %v659, %v692
    %v714 = vsub.f32 %v664, %v692
    %v715 = vsub.f32 %v669, %v692
    %v716 = vsub.f32 %v674, %v692
    %v717 = vadd.f32 %v712, 1e-05
    %v718 = vrsqrt.pop %v717
    %v719 = vmul.f32 %v713, %v718
    %v720 = vmul.f32 %v714, %v718
    %v721 = vmul.f32 %v715, %v718
    %v722 = vmul.f32 %v716, %v718
    %v724 = vlaneseq
    %v725 = vshrl.u32 %v724, 7
    %v726 = vsub.s32 0, %v725
    %v727 = vrot.slane %v677, %v726
    %v729 = vmul.f32 %v719, %v727
    %v730 = vmul.f32 %v720, %v727
    %v731 = vmul.f32 %v721, %v727
    %v732 = vmul.f32 %v722, %v727
    %v734 = vlaneseq
    %v735 = vshrl.u32 %v734, 7
    %v736 = vsub.s32 0, %v735
    %v737 = vrot.slane %v678, %v736
    %v739 = vadd.f32 %v729, %v737
    %v740 = vadd.f32 %v730, %v737
    %v741 = vadd.f32 %v731, %v737
    %v742 = vadd.f32 %v732, %v737
    %vm743 = vcmp.ge.f32.partialorder %v739, 0.0
    %vm744 = vcmp.ge.f32.partialorder %v740, 0.0
    %vm745 = vcmp.ge.f32.partialorder %v741, 0.0
    %vm746 = vcmp.ge.f32.partialorder %v742, 0.0
    %v747 = vmul.f32 %v739, 0.01
    %v748 = vmul.f32 %v740, 0.01
    %v749 = vmul.f32 %v741, 0.01
    %v750 = vmul.f32 %v742, 0.01
    %v751 = vsel %vm743, %v739, %v747
    %v752 = vsel %vm744, %v740, %v748
    %v753 = vsel %vm745, %v741, %v749
    %v754 = vsel %vm746, %v742, %v750
    %v757 = vrot.slane %v752, 7
    %v758 = vrot.slane %v754, 7
    %v763 = vrot.slane %v751, 7
    %v764 = vsel %vm256, %v763, %v757
    %v765 = vrot.slane %v753, 7
    %v766 = vsel %vm256, %v765, %v758
    %v771 = vsel %vm256, %v757, %v763
    %v772 = vsel %vm256, %v758, %v765
    %v773 = vrot.slane %v751, 1
    %v774 = vrot.slane %v752, 1
    %v775 = vsel %vm267, %v773, %v774
    %v776 = vrot.slane %v753, 1
    %v777 = vrot.slane %v754, 1
    %v778 = vsel %vm267, %v776, %v777
    %v783 = vsel %vm267, %v774, %v773
    %v784 = vsel %vm267, %v777, %v776
    %785 = vrot.lane.b32.xlu0 %v751, 8
    %v786 = vpop.permute.xlu0 %785
    %787 = vrot.lane.b32.xlu0 %v752, 8
    %v788 = vpop.permute.xlu0 %787
    %789 = vrot.lane.b32.xlu0 %v753, 8
    %v790 = vpop.permute.xlu0 %789
    %791 = vrot.lane.b32.xlu0 %v754, 8
    %v792 = vpop.permute.xlu0 %791
    %799 = vrot.lane.b32.xlu0 %v775, 16
    %v800 = vpop.permute.xlu0 %799
    %801 = vrot.lane.b32.xlu0 %v783, 16
    %v802 = vpop.permute.xlu0 %801
    %803 = vrot.lane.b32.xlu0 %v778, 16
    %v804 = vpop.permute.xlu0 %803
    %805 = vrot.lane.b32.xlu0 %v784, 16
    %v806 = vpop.permute.xlu0 %805
    %v811 = vsel %vm310, %v771, %v786
    %v812 = vsel %vm310, %v764, %v788
    %v813 = vsel %vm310, %v772, %v790
    %v814 = vsel %vm310, %v766, %v792
    %v815 = vsel %vm564, %v811, %v800
    %v816 = vsel %vm564, %v812, %v802
    %v817 = vsel %vm564, %v813, %v804
    %v818 = vsel %vm564, %v814, %v806
    %s819 = scalar_lea.vmem %s6, 24
    %v820 = vld [vmem:[%s819] sm:$0xff]
    %v821 = vld [vmem:[%s819 + $0x8] sm:$0xff]
    %v822 = vld [vmem:[%s819 + $0x10] sm:$0xff]
    %s823 = scalar_lea.vmem %s7, 1
    %v824 = vld [vmem:[%s823] sm:$0x1]
    %v826 = vlaneseq
    %v827 = vshrl.u32 %v826, 7
    %v828 = vsub.s32 0, %v827
    %v829 = vrot.slane %v824, %v828
    %v832 = vsel %vm579, %v815, 0
    %v835 = vsel %vm579, %v816, 0
    %v838 = vsel %vm579, %v817, 0
    %v841 = vsel %vm579, %v818, 0
    %843 = vmatprep.subr.mxu0 0.0
    %844 = vmatpush1.msra.mxu0 %v820
    %845 = vmatprep.subr.mxu0 0.0
    %846 = vmatpush1.msra.mxu0 %v821
    %847 = vmatprep.subr.mxu0 0.0
    %848 = vmatpush1.msra.mxu0 %v822
    %849 = vmatprep.subr.mxu0 0.0
    %850 = vmatpush1.msra.mxu0 0.0
    %851 = vmatprep.subr.mxu0 0.0
    %852 = vmatpush1.msra.mxu0 0.0
    %853 = vmatprep.subr.mxu0 0.0
    %854 = vmatpush1.msra.mxu0 0.0
    %855 = vmatprep.subr.mxu0 0.0
    %856 = vmatpush1.msra.mxu0 0.0
    %857 = vmatprep.subr.mxu0 0.0
    %858 = vmatpush1.msra.mxu0 0.0
    %859 = vmatprep.subr.mxu0 0.0
    %860 = vmatpush1.msra.mxu0 0.0
    %861 = vmatprep.subr.mxu0 0.0
    %862 = vmatpush1.msra.mxu0 0.0
    %863 = vmatprep.subr.mxu0 0.0
    %864 = vmatpush1.msra.mxu0 0.0
    %865 = vmatprep.subr.mxu0 0.0
    %866 = vmatpush1.msra.mxu0 0.0
    %867 = vmatprep.subr.mxu0 0.0
    %868 = vmatpush1.msra.mxu0 0.0
    %869 = vmatprep.subr.mxu0 0.0
    %870 = vmatpush1.msra.mxu0 0.0
    %871 = vmatprep.subr.mxu0 0.0
    %872 = vmatpush1.msra.mxu0 0.0
    %873 = vmatprep.subr.mxu0 0.0
    %874 = vmatpush1.msra.mxu0 0.0
    %875 = vmatprep.subr.mxu0 0.0
    %876 = vmatpush1.msra.mxu0 0.0
    %877 = vmatprep.subr.mxu0 0.0
    %878 = vmatpush1.msra.mxu0 0.0
    %879 = vmatprep.subr.mxu0 0.0
    %880 = vmatpush1.msra.mxu0 0.0
    %881 = vmatprep.subr.mxu0 0.0
    %882 = vmatpush1.msra.mxu0 0.0
    %883 = vmatprep.subr.mxu0 0.0
    %884 = vmatpush1.msra.mxu0 0.0
    %885 = vmatprep.subr.mxu0 0.0
    %886 = vmatpush1.msra.mxu0 0.0
    %887 = vmatprep.subr.mxu0 0.0
    %888 = vmatpush1.msra.mxu0 0.0
    %889 = vmatprep.subr.mxu0 0.0
    %890 = vmatpush1.msra.mxu0 0.0
    %891 = vmatprep.subr.mxu0 0.0
    %892 = vmatpush1.msra.mxu0 0.0
    %893 = vmatprep.subr.mxu0 0.0
    %894 = vmatpush1.msra.mxu0 0.0
    %895 = vmatprep.subr.mxu0 0.0
    %896 = vmatpush1.msra.mxu0 0.0
    %897 = vmatprep.subr.mxu0 0.0
    %898 = vmatpush1.msra.mxu0 0.0
    %899 = vmatprep.subr.mxu0 0.0
    %900 = vmatpush1.msra.mxu0 0.0
    %901 = vmatprep.subr.mxu0 0.0
    %902 = vmatpush1.msra.mxu0 0.0
    %903 = vmatprep.subr.mxu0 0.0
    %904 = vmatpush1.msra.mxu0 0.0
    %905 = vmatprep.subr.mxu0 0.0
    %906 = vmatpush1.msra.mxu0 0.0
    %907 = vmatprep.mubr.f32.mxu0 0.0
    %908 = vmatmul.mubr.f32.gmra.mrb[0].mxu0 %v832
    %v909 = vpop.f32.mrb[0].mxu0
    %v910 = vadd.f32 %v829, %v909
    %v911 = vpop.f32.mrb[0].mxu0
    %912 = vmatprep.mubr.f32.mxu0 0.0
    %913 = vmatmul.mubr.f32.gmra.mrb[0].mxu0 %v835
    %v914 = vpop.f32.mrb[0].mxu0
    %v915 = vadd.f32 %v829, %v914
    %v916 = vpop.f32.mrb[0].mxu0
    %917 = vmatprep.mubr.f32.mxu0 0.0
    %918 = vmatmul.mubr.f32.gmra.mrb[0].mxu0 %v838
    %v919 = vpop.f32.mrb[0].mxu0
    %v920 = vadd.f32 %v829, %v919
    %v921 = vpop.f32.mrb[0].mxu0
    %922 = vmatprep.mubr.f32.mxu0 0.0
    %923 = vmatmul.mubr.f32.gmra.mrb[0].mxu0 %v841
    %v924 = vpop.f32.mrb[0].mxu0
    %v925 = vadd.f32 %v829, %v924
    %v926 = vpop.f32.mrb[0].mxu0
    %927 = vdwg.mxu0
    %s928 = scalar_lea.vmem %s8, 1
    %v929 = vld [vmem:[%s928] sm:$0x1]
    %s930 = scalar_lea.vmem %s9, 1
    %v931 = vld [vmem:[%s930] sm:$0x1]
    %v932 = vsel %vm310, %v910, 0.0
    %v933 = vsel %vm310, %v915, 0.0
    %v934 = vadd.f32 %v932, %v933
    %v935 = vsel %vm310, %v920, 0.0
    %v936 = vadd.f32 %v934, %v935
    %v937 = vsel %vm310, %v925, 0.0
    %v938 = vadd.f32 %v936, %v937
    %v939 = vrot.slane %v938, 4
    %v940 = vadd.f32 %v938, %v939
    %v941 = vrot.slane %v940, 2
    %v942 = vadd.f32 %v940, %v941
    %v943 = vrot.slane %v942, 1
    %v944 = vadd.f32 %v942, %v943
    %v945 = vmul.f32 %v944, %v440
    %v946 = vmul.f32 %v910, %v910
    %v947 = vmul.f32 %v915, %v915
    %v948 = vmul.f32 %v920, %v920
    %v949 = vmul.f32 %v925, %v925
    %v950 = vsel %vm310, %v946, 0.0
    %v951 = vsel %vm310, %v947, 0.0
    %v952 = vadd.f32 %v950, %v951
    %v953 = vsel %vm310, %v948, 0.0
    %v954 = vadd.f32 %v952, %v953
    %v955 = vsel %vm310, %v949, 0.0
    %v956 = vadd.f32 %v954, %v955
    %v957 = vrot.slane %v956, 4
    %v958 = vadd.f32 %v956, %v957
    %v959 = vrot.slane %v958, 2
    %v960 = vadd.f32 %v958, %v959
    %v961 = vrot.slane %v960, 1
    %v962 = vadd.f32 %v960, %v961
    %v963 = vmul.f32 %v962, %v440
    %v964 = vmul.f32 %v945, %v945
    %v965 = vsub.f32 %v963, %v964
    %v966 = vsub.f32 %v910, %v945
    %v967 = vsub.f32 %v915, %v945
    %v968 = vsub.f32 %v920, %v945
    %v969 = vsub.f32 %v925, %v945
    %v970 = vadd.f32 %v965, 1e-05
    %v971 = vrsqrt.pop %v970
    %v972 = vmul.f32 %v966, %v971
    %v973 = vmul.f32 %v967, %v971
    %v974 = vmul.f32 %v968, %v971
    %v975 = vmul.f32 %v969, %v971
    %v977 = vlaneseq
    %v978 = vshrl.u32 %v977, 7
    %v979 = vsub.s32 0, %v978
    %v980 = vrot.slane %v929, %v979
    %v982 = vmul.f32 %v972, %v980
    %v983 = vmul.f32 %v973, %v980
    %v984 = vmul.f32 %v974, %v980
    %v985 = vmul.f32 %v975, %v980
    %v987 = vlaneseq
    %v988 = vshrl.u32 %v987, 7
    %v989 = vsub.s32 0, %v988
    %v990 = vrot.slane %v931, %v989
    %v992 = vadd.f32 %v982, %v990
    %v993 = vadd.f32 %v983, %v990
    %v994 = vadd.f32 %v984, %v990
    %v995 = vadd.f32 %v985, %v990
    %vm996 = vcmp.ge.f32.partialorder %v992, 0.0
    %vm997 = vcmp.ge.f32.partialorder %v993, 0.0
    %vm998 = vcmp.ge.f32.partialorder %v994, 0.0
    %vm999 = vcmp.ge.f32.partialorder %v995, 0.0
    %v1000 = vmul.f32 %v992, 0.01
    %v1001 = vmul.f32 %v993, 0.01
    %v1002 = vmul.f32 %v994, 0.01
    %v1003 = vmul.f32 %v995, 0.01
    %v1004 = vsel %vm996, %v992, %v1000
    %v1005 = vsel %vm997, %v993, %v1001
    %v1006 = vsel %vm998, %v994, %v1002
    %v1007 = vsel %vm999, %v995, %v1003
    %v1010 = vrot.slane %v1004, 1
    %v1011 = vrot.slane %v1006, 1
    %1012 = vrot.lane.b32.xlu0 %v1010, 8
    %v1013 = vpop.permute.xlu0 %1012
    %1014 = vrot.lane.b32.xlu0 %v1011, 8
    %v1015 = vpop.permute.xlu0 %1014
    %v1018 = vrot.slane %v1004, 2
    %v1019 = vrot.slane %v1006, 2
    %1020 = vrot.lane.b32.xlu0 %v1018, 16
    %v1021 = vpop.permute.xlu0 %1020
    %1022 = vrot.lane.b32.xlu0 %v1019, 16
    %v1023 = vpop.permute.xlu0 %1022
    %v1026 = vrot.slane %v1004, 3
    %v1027 = vrot.slane %v1006, 3
    %1028 = vrot.lane.b32.xlu0 %v1026, 24
    %v1029 = vpop.permute.xlu0 %1028
    %1030 = vrot.lane.b32.xlu0 %v1027, 24
    %v1031 = vpop.permute.xlu0 %1030
    %v1034 = vrot.slane %v1004, 4
    %v1035 = vrot.slane %v1006, 4
    %1036 = vrot.lane.b32.xlu0 %v1034, 32
    %v1037 = vpop.permute.xlu0 %1036
    %1038 = vrot.lane.b32.xlu0 %v1035, 32
    %v1039 = vpop.permute.xlu0 %1038
    %v1042 = vrot.slane %v1004, 5
    %v1043 = vrot.slane %v1006, 5
    %1044 = vrot.lane.b32.xlu0 %v1042, 40
    %v1045 = vpop.permute.xlu0 %1044
    %1046 = vrot.lane.b32.xlu0 %v1043, 40
    %v1047 = vpop.permute.xlu0 %1046
    %v1050 = vrot.slane %v1004, 6
    %v1051 = vrot.slane %v1006, 6
    %1052 = vrot.lane.b32.xlu0 %v1050, 48
    %v1053 = vpop.permute.xlu0 %1052
    %1054 = vrot.lane.b32.xlu0 %v1051, 48
    %v1055 = vpop.permute.xlu0 %1054
    %v1058 = vrot.slane %v1004, 7
    %v1059 = vrot.slane %v1006, 7
    %1060 = vrot.lane.b32.xlu0 %v1058, 56
    %v1061 = vpop.permute.xlu0 %1060
    %1062 = vrot.lane.b32.xlu0 %v1059, 56
    %v1063 = vpop.permute.xlu0 %1062
    %1068 = vrot.lane.b32.xlu0 %v1005, 64
    %v1069 = vpop.permute.xlu0 %1068
    %1070 = vrot.lane.b32.xlu0 %v1007, 64
    %v1071 = vpop.permute.xlu0 %1070
    %v1074 = vrot.slane %v1005, 1
    %v1075 = vrot.slane %v1007, 1
    %1076 = vrot.lane.b32.xlu0 %v1074, 72
    %v1077 = vpop.permute.xlu0 %1076
    %1078 = vrot.lane.b32.xlu0 %v1075, 72
    %v1079 = vpop.permute.xlu0 %1078
    %v1082 = vrot.slane %v1005, 2
    %v1083 = vrot.slane %v1007, 2
    %1084 = vrot.lane.b32.xlu0 %v1082, 80
    %v1085 = vpop.permute.xlu0 %1084
    %1086 = vrot.lane.b32.xlu0 %v1083, 80
    %v1087 = vpop.permute.xlu0 %1086
    %v1090 = vrot.slane %v1005, 3
    %v1091 = vrot.slane %v1007, 3
    %1092 = vrot.lane.b32.xlu0 %v1090, 88
    %v1093 = vpop.permute.xlu0 %1092
    %1094 = vrot.lane.b32.xlu0 %v1091, 88
    %v1095 = vpop.permute.xlu0 %1094
    %v1098 = vrot.slane %v1005, 4
    %v1099 = vrot.slane %v1007, 4
    %1100 = vrot.lane.b32.xlu0 %v1098, 96
    %v1101 = vpop.permute.xlu0 %1100
    %1102 = vrot.lane.b32.xlu0 %v1099, 96
    %v1103 = vpop.permute.xlu0 %1102
    %v1106 = vrot.slane %v1005, 5
    %v1107 = vrot.slane %v1007, 5
    %1108 = vrot.lane.b32.xlu0 %v1106, 104
    %v1109 = vpop.permute.xlu0 %1108
    %1110 = vrot.lane.b32.xlu0 %v1107, 104
    %v1111 = vpop.permute.xlu0 %1110
    %v1114 = vrot.slane %v1005, 6
    %v1115 = vrot.slane %v1007, 6
    %1116 = vrot.lane.b32.xlu0 %v1114, 112
    %v1117 = vpop.permute.xlu0 %1116
    %1118 = vrot.lane.b32.xlu0 %v1115, 112
    %v1119 = vpop.permute.xlu0 %1118
    %v1122 = vrot.slane %v1005, 7
    %v1123 = vrot.slane %v1007, 7
    %1124 = vrot.lane.b32.xlu0 %v1122, 120
    %v1125 = vpop.permute.xlu0 %1124
    %1126 = vrot.lane.b32.xlu0 %v1123, 120
    %v1127 = vpop.permute.xlu0 %1126
    %v1130 = vsel %vm310, %v1004, %v1013
    %v1131 = vsel %vm310, %v1006, %v1015
    %v1132 = vsel %vm564, %v1130, %v1021
    %v1133 = vsel %vm564, %v1131, %v1023
    %v1134 = vsel %vm579, %v1132, %v1029
    %v1135 = vsel %vm579, %v1133, %v1031
    %vm1136 = vcmask 261120
    %v1137 = vsel %vm1136, %v1134, %v1037
    %v1138 = vsel %vm1136, %v1135, %v1039
    %vm1139 = vcmask 326656
    %v1140 = vsel %vm1139, %v1137, %v1045
    %v1141 = vsel %vm1139, %v1138, %v1047
    %vm1142 = vcmask 392192
    %v1143 = vsel %vm1142, %v1140, %v1053
    %v1144 = vsel %vm1142, %v1141, %v1055
    %vm1145 = vcmask 457728
    %v1146 = vsel %vm1145, %v1143, %v1061
    %v1147 = vsel %vm1145, %v1144, %v1063
    %vm1148 = vcmask 523264
    %v1149 = vsel %vm1148, %v1146, %v1069
    %v1150 = vsel %vm1148, %v1147, %v1071
    %vm1151 = vcmask 588800
    %v1152 = vsel %vm1151, %v1149, %v1077
    %v1153 = vsel %vm1151, %v1150, %v1079
    %vm1154 = vcmask 654336
    %v1155 = vsel %vm1154, %v1152, %v1085
    %v1156 = vsel %vm1154, %v1153, %v1087
    %vm1157 = vcmask 719872
    %v1158 = vsel %vm1157, %v1155, %v1093
    %v1159 = vsel %vm1157, %v1156, %v1095
    %vm1160 = vcmask 785408
    %v1161 = vsel %vm1160, %v1158, %v1101
    %v1162 = vsel %vm1160, %v1159, %v1103
    %vm1163 = vcmask 850944
    %v1164 = vsel %vm1163, %v1161, %v1109
    %v1165 = vsel %vm1163, %v1162, %v1111
    %vm1166 = vcmask 916480
    %v1167 = vsel %vm1166, %v1164, %v1117
    %v1168 = vsel %vm1166, %v1165, %v1119
    %vm1169 = vcmask 982016
    %v1170 = vsel %vm1169, %v1167, %v1125
    %v1171 = vsel %vm1169, %v1168, %v1127
    %v1172 = vld [vmem:[%s10] sm:$0xff]
    %v1173 = vld [vmem:[%s10 + $0x8] sm:$0xff]
    %v1174 = vld [vmem:[%s10 + $0x10] sm:$0xff]
    %v1175 = vld [vmem:[%s10 + $0x18] sm:$0xff]
    %v1176 = vld [vmem:[%s10 + $0x20] sm:$0xff]
    %v1177 = vld [vmem:[%s10 + $0x28] sm:$0xff]
    %v1178 = vld [vmem:[%s10 + $0x30] sm:$0xff]
    %v1179 = vld [vmem:[%s10 + $0x38] sm:$0xff]
    %v1180 = vld [vmem:[%s10 + $0x40] sm:$0xff]
    %v1181 = vld [vmem:[%s10 + $0x48] sm:$0xff]
    %v1182 = vld [vmem:[%s10 + $0x50] sm:$0xff]
    %v1183 = vld [vmem:[%s10 + $0x58] sm:$0xff]
    %v1184 = vld [vmem:[%s10 + $0x60] sm:$0xff]
    %v1185 = vld [vmem:[%s10 + $0x68] sm:$0xff]
    %v1186 = vld [vmem:[%s10 + $0x70] sm:$0xff]
    %v1187 = vld [vmem:[%s10 + $0x78] sm:$0xff]
    %v1188 = vld [vmem:[%s11] sm:$0x1]
    %v1191 = vrot.slane %v1171, 7
    %vm1192 = vcmask 1041409
    %v1193 = vsel %vm1192, %v1191, %v1170
    %v1196 = vcombine.low %v1188, %v1188
    %v1198 = vunpack.c.l.s4 1966171168
    %v1199 = vunpack.c.0.s8 %v1198
    %v1200 = vlaneseq
    %v1201 = vshrl.u32 %v1200, 7
    %v1202 = vsub.s32 %v1199, %v1201
    %v1203 = vrot.slane %v1196, %v1202
    %v1205 = vunpack.c.l.s4 1966171168
    %v1206 = vunpack.c.0.s8 %v1205
    %v1207 = vlaneseq
    %v1208 = vshrl.u32 %v1207, 7
    %v1209 = vsub.s32 %v1206, %v1208
    %v1210 = vrot.slane %v1203, %v1209
    %1212 = vmatprep.subr.mxu0 0.0
    %1213 = vmatpush1.msra.mxu0 %v1172
    %1214 = vmatprep.subr.mxu0 0.0
    %1215 = vmatpush1.msra.mxu0 %v1173
    %1216 = vmatprep.subr.mxu0 0.0
    %1217 = vmatpush1.msra.mxu0 %v1174
    %1218 = vmatprep.subr.mxu0 0.0
    %1219 = vmatpush1.msra.mxu0 %v1175
    %1220 = vmatprep.subr.mxu0 0.0
    %1221 = vmatpush1.msra.mxu0 %v1176
    %1222 = vmatprep.subr.mxu0 0.0
    %1223 = vmatpush1.msra.mxu0 %v1177
    %1224 = vmatprep.subr.mxu0 0.0
    %1225 = vmatpush1.msra.mxu0 %v1178
    %1226 = vmatprep.subr.mxu0 0.0
    %1227 = vmatpush1.msra.mxu0 %v1179
    %1228 = vmatprep.subr.mxu0 0.0
    %1229 = vmatpush1.msra.mxu0 %v1180
    %1230 = vmatprep.subr.mxu0 0.0
    %1231 = vmatpush1.msra.mxu0 %v1181
    %1232 = vmatprep.subr.mxu0 0.0
    %1233 = vmatpush1.msra.mxu0 %v1182
    %1234 = vmatprep.subr.mxu0 0.0
    %1235 = vmatpush1.msra.mxu0 %v1183
    %1236 = vmatprep.subr.mxu0 0.0
    %1237 = vmatpush1.msra.mxu0 %v1184
    %1238 = vmatprep.subr.mxu0 0.0
    %1239 = vmatpush1.msra.mxu0 %v1185
    %1240 = vmatprep.subr.mxu0 0.0
    %1241 = vmatpush1.msra.mxu0 %v1186
    %1242 = vmatprep.subr.mxu0 0.0
    %1243 = vmatpush1.msra.mxu0 %v1187
    %1244 = vmatprep.subr.mxu0 0.0
    %1245 = vmatpush1.msra.mxu0 0.0
    %1246 = vmatprep.subr.mxu0 0.0
    %1247 = vmatpush1.msra.mxu0 0.0
    %1248 = vmatprep.subr.mxu0 0.0
    %1249 = vmatpush1.msra.mxu0 0.0
    %1250 = vmatprep.subr.mxu0 0.0
    %1251 = vmatpush1.msra.mxu0 0.0
    %1252 = vmatprep.subr.mxu0 0.0
    %1253 = vmatpush1.msra.mxu0 0.0
    %1254 = vmatprep.subr.mxu0 0.0
    %1255 = vmatpush1.msra.mxu0 0.0
    %1256 = vmatprep.subr.mxu0 0.0
    %1257 = vmatpush1.msra.mxu0 0.0
    %1258 = vmatprep.subr.mxu0 0.0
    %1259 = vmatpush1.msra.mxu0 0.0
    %1260 = vmatprep.subr.mxu0 0.0
    %1261 = vmatpush1.msra.mxu0 0.0
    %1262 = vmatprep.subr.mxu0 0.0
    %1263 = vmatpush1.msra.mxu0 0.0
    %1264 = vmatprep.subr.mxu0 0.0
    %1265 = vmatpush1.msra.mxu0 0.0
    %1266 = vmatprep.subr.mxu0 0.0
    %1267 = vmatpush1.msra.mxu0 0.0
    %1268 = vmatprep.subr.mxu0 0.0
    %1269 = vmatpush1.msra.mxu0 0.0
    %1270 = vmatprep.subr.mxu0 0.0
    %1271 = vmatpush1.msra.mxu0 0.0
    %1272 = vmatprep.subr.mxu0 0.0
    %1273 = vmatpush1.msra.mxu0 0.0
    %1274 = vmatprep.subr.mxu0 0.0
    %1275 = vmatpush1.msra.mxu0 0.0
    %1276 = vmatprep.mubr.f32.mxu0 0.0
    %1277 = vmatmul.mubr.f32.gmra.mrb[0].mxu0 %v1193
    %v1278 = vpop.f32.mrb[0].mxu0
    %v1279 = vadd.f32 %v1210, %v1278
    %v1280 = vpop.f32.mrb[0].mxu0
    %1281 = vdwg.mxu0
    %v1284 = vunpack.c.l.s4 1966171168
    %v1285 = vunpack.c.0.s8 %v1284
    %v1286 = vlaneseq
    %v1287 = vshrl.u32 %v1286, 7
    %v1288 = vsub.s32 %v1285, %v1287
    %v1289 = vrot.slane %v1279, %v1288
    %v1290 = vcombine.high %v1289, %v1289
    %v1292 = vunpack.c.l.s4 1966171168
    %v1293 = vunpack.c.0.s8 %v1292
    %v1294 = vlaneseq
    %v1295 = vshrl.u32 %v1294, 7
    %v1296 = vsub.s32 %v1293, %v1295
    %v1297 = vrot.slane %v1289, %v1296
    %v1299 = vunpack.c.l.s4 1966171168
    %v1300 = vunpack.c.0.s8 %v1299
    %v1301 = vlaneseq
    %v1302 = vshrl.u32 %v1301, 7
    %v1303 = vsub.s32 %v1300, %v1302
    %v1304 = vrot.slane %v1290, %v1303
    %v1307 = vmul.f32 %v1297, %v1297
    %v1308 = vmul.f32 %v1304, %v1304
    %vm1309 = vcmask 122880
    %v1310 = vsel %vm1309, %v1307, 0.0
    %1311 = vadd.xlane.f32.xlu0 %v1310
    %v1312 = vpop.xlane.xlu0 %1311
    %v1313 = vsel %vm1309, %v1308, 0.0
    %1314 = vadd.xlane.f32.xlu0 %v1313
    %v1315 = vpop.xlane.xlu0 %1314
    %v1316 = vmax.f32 %v1312, 1e-24
    %v1317 = vmax.f32 %v1315, 1e-24
    %v1318 = vrsqrt.pop %v1316
    %v1319 = vrsqrt.pop %v1317
    %v1320 = vmul.f32 %v1297, %v1318
    %v1321 = vmul.f32 %v1304, %v1319
    %v1324 = vlaneseq
    %v1325 = vshrl.u32 %v1324, 7
    %v1326 = vsub.s32 0, %v1325
    %v1327 = vrot.slane %v1307, %v1326
    %v1328 = vlaneseq
    %v1329 = vshrl.u32 %v1328, 7
    %v1330 = vsub.s32 0, %v1329
    %v1331 = vrot.slane %v1308, %v1330
    %1332 = vrot.lane.b32.xlu0 %v1327, 112
    %v1333 = vpop.permute.xlu0 %1332
    %1334 = vrot.lane.b32.xlu0 %v1331, 112
    %v1335 = vpop.permute.xlu0 %1334
    %v1338 = vsel %vm1309, %v1333, 0.0
    %1339 = vadd.xlane.f32.xlu0 %v1338
    %v1340 = vpop.xlane.xlu0 %1339
    %v1341 = vsel %vm1309, %v1335, 0.0
    %1342 = vadd.xlane.f32.xlu0 %v1341
    %v1343 = vpop.xlane.xlu0 %1342
    %v1344 = vmax.f32 %v1340, 1e-24
    %v1345 = vmax.f32 %v1343, 1e-24
    %v1346 = vrsqrt.pop %v1344
    %v1347 = vrsqrt.pop %v1345
    %v1348 = vmul.f32 %v1297, %v1346
    %v1349 = vmul.f32 %v1304, %v1347
    %1350 = vrot.lane.b32.xlu0 %v1327, 96
    %v1351 = vpop.permute.xlu0 %1350
    %1352 = vrot.lane.b32.xlu0 %v1331, 96
    %v1353 = vpop.permute.xlu0 %1352
    %v1356 = vsel %vm1309, %v1351, 0.0
    %1357 = vadd.xlane.f32.xlu0 %v1356
    %v1358 = vpop.xlane.xlu0 %1357
    %v1359 = vsel %vm1309, %v1353, 0.0
    %1360 = vadd.xlane.f32.xlu0 %v1359
    %v1361 = vpop.xlane.xlu0 %1360
    %v1362 = vmax.f32 %v1358, 1e-24
    %v1363 = vmax.f32 %v1361, 1e-24
    %v1364 = vrsqrt.pop %v1362
    %v1365 = vrsqrt.pop %v1363
    %v1366 = vmul.f32 %v1297, %v1364
    %v1367 = vmul.f32 %v1304, %v1365
    %1368 = vrot.lane.b32.xlu0 %v1327, 80
    %v1369 = vpop.permute.xlu0 %1368
    %1370 = vrot.lane.b32.xlu0 %v1331, 80
    %v1371 = vpop.permute.xlu0 %1370
    %v1374 = vsel %vm1309, %v1369, 0.0
    %1375 = vadd.xlane.f32.xlu0 %v1374
    %v1376 = vpop.xlane.xlu0 %1375
    %v1377 = vsel %vm1309, %v1371, 0.0
    %1378 = vadd.xlane.f32.xlu0 %v1377
    %v1379 = vpop.xlane.xlu0 %1378
    %v1380 = vmax.f32 %v1376, 1e-24
    %v1381 = vmax.f32 %v1379, 1e-24
    %v1382 = vrsqrt.pop %v1380
    %v1383 = vrsqrt.pop %v1381
    %v1384 = vmul.f32 %v1297, %v1382
    %v1385 = vmul.f32 %v1304, %v1383
    %1386 = vrot.lane.b32.xlu0 %v1327, 64
    %v1387 = vpop.permute.xlu0 %1386
    %1388 = vrot.lane.b32.xlu0 %v1331, 64
    %v1389 = vpop.permute.xlu0 %1388
    %v1392 = vsel %vm1309, %v1387, 0.0
    %1393 = vadd.xlane.f32.xlu0 %v1392
    %v1394 = vpop.xlane.xlu0 %1393
    %v1395 = vsel %vm1309, %v1389, 0.0
    %1396 = vadd.xlane.f32.xlu0 %v1395
    %v1397 = vpop.xlane.xlu0 %1396
    %v1398 = vmax.f32 %v1394, 1e-24
    %v1399 = vmax.f32 %v1397, 1e-24
    %v1400 = vrsqrt.pop %v1398
    %v1401 = vrsqrt.pop %v1399
    %v1402 = vmul.f32 %v1297, %v1400
    %v1403 = vmul.f32 %v1304, %v1401
    %1404 = vrot.lane.b32.xlu0 %v1327, 48
    %v1405 = vpop.permute.xlu0 %1404
    %1406 = vrot.lane.b32.xlu0 %v1331, 48
    %v1407 = vpop.permute.xlu0 %1406
    %v1410 = vsel %vm1309, %v1405, 0.0
    %1411 = vadd.xlane.f32.xlu0 %v1410
    %v1412 = vpop.xlane.xlu0 %1411
    %v1413 = vsel %vm1309, %v1407, 0.0
    %1414 = vadd.xlane.f32.xlu0 %v1413
    %v1415 = vpop.xlane.xlu0 %1414
    %v1416 = vmax.f32 %v1412, 1e-24
    %v1417 = vmax.f32 %v1415, 1e-24
    %v1418 = vrsqrt.pop %v1416
    %v1419 = vrsqrt.pop %v1417
    %v1420 = vmul.f32 %v1297, %v1418
    %v1421 = vmul.f32 %v1304, %v1419
    %1422 = vrot.lane.b32.xlu0 %v1327, 32
    %v1423 = vpop.permute.xlu0 %1422
    %1424 = vrot.lane.b32.xlu0 %v1331, 32
    %v1425 = vpop.permute.xlu0 %1424
    %v1428 = vsel %vm1309, %v1423, 0.0
    %1429 = vadd.xlane.f32.xlu0 %v1428
    %v1430 = vpop.xlane.xlu0 %1429
    %v1431 = vsel %vm1309, %v1425, 0.0
    %1432 = vadd.xlane.f32.xlu0 %v1431
    %v1433 = vpop.xlane.xlu0 %1432
    %v1434 = vmax.f32 %v1430, 1e-24
    %v1435 = vmax.f32 %v1433, 1e-24
    %v1436 = vrsqrt.pop %v1434
    %v1437 = vrsqrt.pop %v1435
    %v1438 = vmul.f32 %v1297, %v1436
    %v1439 = vmul.f32 %v1304, %v1437
    %1440 = vrot.lane.b32.xlu0 %v1327, 16
    %v1441 = vpop.permute.xlu0 %1440
    %1442 = vrot.lane.b32.xlu0 %v1331, 16
    %v1443 = vpop.permute.xlu0 %1442
    %v1446 = vsel %vm1309, %v1441, 0.0
    %1447 = vadd.xlane.f32.xlu0 %v1446
    %v1448 = vpop.xlane.xlu0 %1447
    %v1449 = vsel %vm1309, %v1443, 0.0
    %1450 = vadd.xlane.f32.xlu0 %v1449
    %v1451 = vpop.xlane.xlu0 %1450
    %v1452 = vmax.f32 %v1448, 1e-24
    %v1453 = vmax.f32 %v1451, 1e-24
    %v1454 = vrsqrt.pop %v1452
    %v1455 = vrsqrt.pop %v1453
    %v1456 = vmul.f32 %v1297, %v1454
    %v1457 = vmul.f32 %v1304, %v1455
    %v1458 = vsel %vm564, %v1320, %v1348
    %v1459 = vsel %vm564, %v1321, %v1349
    %v1460 = vsel %vm1136, %v1458, %v1366
    %v1461 = vsel %vm1136, %v1459, %v1367
    %v1462 = vsel %vm1142, %v1460, %v1384
    %v1463 = vsel %vm1142, %v1461, %v1385
    %v1464 = vsel %vm1148, %v1462, %v1402
    %v1465 = vsel %vm1148, %v1463, %v1403
    %v1466 = vsel %vm1154, %v1464, %v1420
    %v1467 = vsel %vm1154, %v1465, %v1421
    %v1468 = vsel %vm1160, %v1466, %v1438
    %v1469 = vsel %vm1160, %v1467, %v1439
    %v1470 = vsel %vm1166, %v1468, %v1456
    %v1471 = vsel %vm1166, %v1469, %v1457
    %1472 = vst [vmem:[#allocation5] sm:$0x1] %v1470
    %1473 = vst [vmem:[#allocation5 + $0x1] sm:$0x1] %v1471
    %v1474 = vld [vmem:[%s12] sm:$0xff]
    %v1475 = vld [vmem:[%s12 + $0x8] sm:$0xff]
    %v1476 = vld [vmem:[%s12 + $0x10] sm:$0xff]
    %v1477 = vld [vmem:[%s12 + $0x18] sm:$0xff]
    %v1478 = vld [vmem:[%s12 + $0x20] sm:$0xff]
    %v1479 = vld [vmem:[%s12 + $0x28] sm:$0xff]
    %v1480 = vld [vmem:[%s12 + $0x30] sm:$0xff]
    %v1481 = vld [vmem:[%s12 + $0x38] sm:$0xff]
    %v1482 = vld [vmem:[%s12 + $0x40] sm:$0xff]
    %v1483 = vld [vmem:[%s12 + $0x48] sm:$0xff]
    %v1484 = vld [vmem:[%s12 + $0x50] sm:$0xff]
    %v1485 = vld [vmem:[%s12 + $0x58] sm:$0xff]
    %v1486 = vld [vmem:[%s12 + $0x60] sm:$0xff]
    %v1487 = vld [vmem:[%s12 + $0x68] sm:$0xff]
    %v1488 = vld [vmem:[%s12 + $0x70] sm:$0xff]
    %v1489 = vld [vmem:[%s12 + $0x78] sm:$0xff]
    %v1490 = vld [vmem:[%s13] sm:$0x1]
    %v1492 = vcombine.low %v1490, %v1490
    %v1494 = vunpack.c.l.s4 1966171168
    %v1495 = vunpack.c.0.s8 %v1494
    %v1496 = vlaneseq
    %v1497 = vshrl.u32 %v1496, 7
    %v1498 = vsub.s32 %v1495, %v1497
    %v1499 = vrot.slane %v1492, %v1498
    %v1501 = vunpack.c.l.s4 1966171168
    %v1502 = vunpack.c.0.s8 %v1501
    %v1503 = vlaneseq
    %v1504 = vshrl.u32 %v1503, 7
    %v1505 = vsub.s32 %v1502, %v1504
    %v1506 = vrot.slane %v1499, %v1505
    %1508 = vmatprep.subr.mxu0 0.0
    %1509 = vmatpush1.msra.mxu0 %v1474
    %1510 = vmatprep.subr.mxu0 0.0
    %1511 = vmatpush1.msra.mxu0 %v1475
    %1512 = vmatprep.subr.mxu0 0.0
    %1513 = vmatpush1.msra.mxu0 %v1476
    %1514 = vmatprep.subr.mxu0 0.0
    %1515 = vmatpush1.msra.mxu0 %v1477
    %1516 = vmatprep.subr.mxu0 0.0
    %1517 = vmatpush1.msra.mxu0 %v1478
    %1518 = vmatprep.subr.mxu0 0.0
    %1519 = vmatpush1.msra.mxu0 %v1479
    %1520 = vmatprep.subr.mxu0 0.0
    %1521 = vmatpush1.msra.mxu0 %v1480
    %1522 = vmatprep.subr.mxu0 0.0
    %1523 = vmatpush1.msra.mxu0 %v1481
    %1524 = vmatprep.subr.mxu0 0.0
    %1525 = vmatpush1.msra.mxu0 %v1482
    %1526 = vmatprep.subr.mxu0 0.0
    %1527 = vmatpush1.msra.mxu0 %v1483
    %1528 = vmatprep.subr.mxu0 0.0
    %1529 = vmatpush1.msra.mxu0 %v1484
    %1530 = vmatprep.subr.mxu0 0.0
    %1531 = vmatpush1.msra.mxu0 %v1485
    %1532 = vmatprep.subr.mxu0 0.0
    %1533 = vmatpush1.msra.mxu0 %v1486
    %1534 = vmatprep.subr.mxu0 0.0
    %1535 = vmatpush1.msra.mxu0 %v1487
    %1536 = vmatprep.subr.mxu0 0.0
    %1537 = vmatpush1.msra.mxu0 %v1488
    %1538 = vmatprep.subr.mxu0 0.0
    %1539 = vmatpush1.msra.mxu0 %v1489
    %1540 = vmatprep.subr.mxu0 0.0
    %1541 = vmatpush1.msra.mxu0 0.0
    %1542 = vmatprep.subr.mxu0 0.0
    %1543 = vmatpush1.msra.mxu0 0.0
    %1544 = vmatprep.subr.mxu0 0.0
    %1545 = vmatpush1.msra.mxu0 0.0
    %1546 = vmatprep.subr.mxu0 0.0
    %1547 = vmatpush1.msra.mxu0 0.0
    %1548 = vmatprep.subr.mxu0 0.0
    %1549 = vmatpush1.msra.mxu0 0.0
    %1550 = vmatprep.subr.mxu0 0.0
    %1551 = vmatpush1.msra.mxu0 0.0
    %1552 = vmatprep.subr.mxu0 0.0
    %1553 = vmatpush1.msra.mxu0 0.0
    %1554 = vmatprep.subr.mxu0 0.0
    %1555 = vmatpush1.msra.mxu0 0.0
    %1556 = vmatprep.subr.mxu0 0.0
    %1557 = vmatpush1.msra.mxu0 0.0
    %1558 = vmatprep.subr.mxu0 0.0
    %1559 = vmatpush1.msra.mxu0 0.0
    %1560 = vmatprep.subr.mxu0 0.0
    %1561 = vmatpush1.msra.mxu0 0.0
    %1562 = vmatprep.subr.mxu0 0.0
    %1563 = vmatpush1.msra.mxu0 0.0
    %1564 = vmatprep.subr.mxu0 0.0
    %1565 = vmatpush1.msra.mxu0 0.0
    %1566 = vmatprep.subr.mxu0 0.0
    %1567 = vmatpush1.msra.mxu0 0.0
    %1568 = vmatprep.subr.mxu0 0.0
    %1569 = vmatpush1.msra.mxu0 0.0
    %1570 = vmatprep.subr.mxu0 0.0
    %1571 = vmatpush1.msra.mxu0 0.0
    %1572 = vmatprep.mubr.f32.mxu0 0.0
    %1573 = vmatmul.mubr.f32.gmra.mrb[0].mxu0 %v1193
    %v1574 = vpop.f32.mrb[0].mxu0
    %v1575 = vadd.f32 %v1506, %v1574
    %v1576 = vpop.f32.mrb[0].mxu0
    %1577 = vdwg.mxu0
    %v1580 = vunpack.c.l.s4 1966171168
    %v1581 = vunpack.c.0.s8 %v1580
    %v1582 = vlaneseq
    %v1583 = vshrl.u32 %v1582, 7
    %v1584 = vsub.s32 %v1581, %v1583
    %v1585 = vrot.slane %v1575, %v1584
    %v1586 = vcombine.high %v1585, %v1585
    %v1588 = vunpack.c.l.s4 1966171168
    %v1589 = vunpack.c.0.s8 %v1588
    %v1590 = vlaneseq
    %v1591 = vshrl.u32 %v1590, 7
    %v1592 = vsub.s32 %v1589, %v1591
    %v1593 = vrot.slane %v1585, %v1592
    %v1595 = vunpack.c.l.s4 1966171168
    %v1596 = vunpack.c.0.s8 %v1595
    %v1597 = vlaneseq
    %v1598 = vshrl.u32 %v1597, 7
    %v1599 = vsub.s32 %v1596, %v1598
    %v1600 = vrot.slane %v1586, %v1599
    %v1603 = vsub.f32 0.0, %v1593
    %v1604 = vsub.f32 0.0, %v1600
    %v1605 = vmul.f32 %v1603, 1.442695
    %v1606 = vpow.pop %v1605
    %v1607 = vmul.f32 %v1604, 1.442695
    %v1608 = vpow.pop %v1607
    %v1609 = vadd.f32 %v1606, 1.0
    %v1610 = vadd.f32 %v1608, 1.0
    %v1611 = vrcp.pop %v1609
    %v1612 = vmul.f32 20.0, %v1611
    %v1613 = vrcp.pop %v1610
    %v1614 = vmul.f32 20.0, %v1613
    %vm1615 = vcmask 57344
    %1616 = vst.msk [vmem:[#allocation6] sm:$0x1] %vm1615, %v1612
    %1617 = vst.msk [vmem:[#allocation6 + $0x1] sm:$0x1] %vm1615, %v1614
    // Predicated region
    $region62: #{tpu_custom_call.1} parent=1 // pred_check
      _
    $region63: #{tpu_custom_call.1} parent=1 // pred_check_branch
      %1619 = sbr.rel (0) target = $region65
    $region64: #{tpu_custom_call.1} parent=1 // pred_region
      %s1621 = ssub.s32 32, 32
      %1622 = vsyncadd [#allocation3], %s1621
      %s1623 = sshll.u32 [#allocation5], 4
      %s1624 = int_to_ptr.vmem [resolvable:$true] %s1623
      %1629 = dma.vmem_to_hbm [thread:$0]  %s1624, 32, %s14, [#allocation3], 16, 16, 1
    $region65: #{tpu_custom_call.1} parent=1 // pred_fallthru
      _
    // Predicated region
    $region66: #{tpu_custom_call.1} parent=1 // pred_check
      _
    $region67: #{tpu_custom_call.1} parent=1 // pred_check_branch
      %1631 = sbr.rel (0) target = $region69
    $region68: #{tpu_custom_call.1} parent=1 // pred_region
      %s1633 = ssub.s32 32, 32
      %1634 = vsyncadd [#allocation7], %s1633
      %s1635 = sshll.u32 [#allocation6], 4
      %s1636 = int_to_ptr.vmem [resolvable:$true] %s1635
      %1641 = dma.vmem_to_hbm [thread:$0]  %s1636, 32, %s15, [#allocation7], 16, 16, 1
    $region69: #{tpu_custom_call.1} parent=1 // pred_fallthru
      _
    // Predicated region
    $region70: #{tpu_custom_call.1} parent=1 // pred_check
      _
    $region71: #{tpu_custom_call.1} parent=1 // pred_check_branch
      %1643 = sbr.rel (0) target = $region73
    $region72: #{tpu_custom_call.1} parent=1 // pred_region
      %1644 = dma.done [#allocation3], 32
    $region73: #{tpu_custom_call.1} parent=1 // pred_fallthru
      _
    // Predicated region
    $region74: #{tpu_custom_call.1} parent=1 // pred_check
      _
    $region75: #{tpu_custom_call.1} parent=1 // pred_check_branch
      %1646 = sbr.rel (0) target = $region77
    $region76: #{tpu_custom_call.1} parent=1 // pred_region
      %1647 = dma.done [#allocation7], 32
    $region77: #{tpu_custom_call.1} parent=1 // pred_fallthru
      _
    %1648 = vsyncpa [#allocation3], 1
    %1649 = vsyncpa [#allocation7], 1
    %1650 = vsyncpa [#allocation4], 1

</llo_original>
